<compile_context>
chip_gen: v5e
topology: v5e:2x2
jax: 0.10.0
libtpu: 0.0.40
codegen_flags: <defaults>
</compile_context>

<pallas_src>
import jax
import jax.numpy as jnp
from jax.experimental import pallas as pl
from jax.experimental.pallas import tpu as pltpu  # noqa: F401  (TPU backend)
import numpy as np


# ----------------------------- configuration --------------------------------
INPUT_DIM = 4
NUM_OP_MODES = 5
SEQ_LEN = 8
EMBED_DIM = 16
STATE_DIM = 64
NUM_S5_LAYERS = 3
NUM_CONTROL_VARIATES = 3
FC_HIDDEN = (64, 32)
CONCAT_DIM = INPUT_DIM + EMBED_DIM          # C = 20
FC_IN = CONCAT_DIM + 1                      # C + 1 = 21
BATCH = 2
LN_EPS = 1e-5


# ----------------------------- fused Pallas kernel ---------------------------
def causal_model_kernel(op_ref, sig_ref, eext_ref, sext_ref, apow_ref,
                        bmat_ref, cmat_ref, dvec_ref, gvec_ref, bevec_ref,
                        sel_ref, cv_ref, w1s5_ref, w1cv_ref, b1_ref,
                        w2_ref, b2_ref, w3_ref, b3_ref, out_ref):
    """Single-invocation fused forward pass.

    op_ref   (B*S, 1) int32          sig_ref  (B*S, D)
    eext_ref (M, C)  emb table padded to C cols; sext_ref (D, C) = [0 | I_D]
    apow_ref (L, B*S, B*S, P) causal decay (block-diag over batch)
    bmat/cmat/dvec/gvec/bevec: per-layer S5 params
    sel_ref  (B, B*S) last-time-step row selector
    cv_ref   (B, V); w1s5 (C, V*H1); w1cv (V, V*H1); w2 (V*H1, V*H2);
    w3 (V*H2, V); biases row vectors.  out_ref (B, V).
    """
    bs = sig_ref.shape[0]
    num_modes = eext_ref.shape[0]
    num_layers = bmat_ref.shape[0]

    # Embedding lookup (one-hot matmul) fused with the [embed | signals] concat.
    modes = jax.lax.broadcasted_iota(jnp.int32, (bs, num_modes), 1)
    onehot = (op_ref[...] == modes).astype(jnp.float32)            # (BS, M)
    x = (jnp.dot(onehot, eext_ref[...], preferred_element_type=jnp.float32)
         + jnp.dot(sig_ref[...], sext_ref[...],
                   preferred_element_type=jnp.float32))            # (BS, C)

    # S5 backbone (static, small layer loop).
    for layer in range(num_layers):
        gamma = gvec_ref[layer]                                    # (1, C)
        beta = bevec_ref[layer]                                    # (1, C)
        mu = jnp.mean(x, axis=-1, keepdims=True)
        var = jnp.mean((x - mu) ** 2, axis=-1, keepdims=True)
        z = (x - mu) * jax.lax.rsqrt(var + LN_EPS) * gamma + beta  # (BS, C)

        bu = jnp.dot(z, bmat_ref[layer],
                     preferred_element_type=jnp.float32)           # (BS, P)
        # Vectorized diagonal recurrence: y[t] = sum_k a^(t-k) * bu[k]
        y = jnp.sum(apow_ref[layer] * bu[None, :, :], axis=1)      # (BS, P)

        ssm = jnp.dot(y, cmat_ref[layer],
                      preferred_element_type=jnp.float32)          # (BS, C)
        ssm = ssm + z * dvec_ref[layer]
        x = x + jax.nn.gelu(ssm, approximate=True)

    # Last-time-step features per batch (row-select via tiny matmul).
    s5_last = jnp.dot(sel_ref[...], x,
                      preferred_element_type=jnp.float32)          # (B, C)

    # Packed block-diagonal FC heads: (B, C)->(B, V*H1)->(B, V*H2)->(B, V).
    h1 = jax.nn.relu(
        jnp.dot(s5_last, w1s5_ref[...], preferred_element_type=jnp.float32)
        + jnp.dot(cv_ref[...], w1cv_ref[...],
                  preferred_element_type=jnp.float32)
        + b1_ref[...])
    h2 = jax.nn.relu(
        jnp.dot(h1, w2_ref[...], preferred_element_type=jnp.float32)
        + b2_ref[...])
    out_ref[...] = (jnp.dot(h2, w3_ref[...],
                            preferred_element_type=jnp.float32)
                    + b3_ref[...])                                 # (B, V)


# ----------------------------- wrapper ---------------------------------------
def causal_model_forward(packed, op_x, input_signals, cur_control_values):
    B, S = op_x.shape
    D = input_signals.shape[-1]
    V = cur_control_values.shape[-1]
    op2 = op_x.reshape(B * S, 1).astype(jnp.int32)          # free metadata reshape
    sig2 = input_signals.reshape(B * S, D).astype(jnp.float32)
    return pl.pallas_call(
        causal_model_kernel,
        out_shape=jax.ShapeDtypeStruct((B, V), jnp.float32),
    )(op2, sig2, packed["e_ext"], packed["s_ext"], packed["apow"],
      packed["s5_B"], packed["s5_C"], packed["s5_D"], packed["s5_g"],
      packed["s5_be"], packed["sel"], cur_control_values.astype(jnp.float32),
      packed["w1_s5"], packed["w1_cv"], packed["b1"], packed["w2"],
      packed["b2"], packed["w3"], packed["b3"])


# ----------------------------- parameter packing -----------------------------
def pack_params(params, batch, seq_len):
    """One-time host-side packing (embedding injection matrices, causal decay
    tensor, last-step selector, block-diagonal FC heads)."""
    L, C, P = params["s5_B"].shape
    V, fc_in, H1 = params["fc_w1"].shape
    H2 = params["fc_w2"].shape[2]
    M, E = params["emb"].shape
    D = C - E
    BS = batch * seq_len

    # embedding / signal injection matrices: x = onehot @ E_ext + sig @ S_ext
    e_ext = jnp.zeros((M, C), jnp.float32).at[:, :E].set(params["emb"])
    s_ext = jnp.zeros((D, C), jnp.float32).at[:, E:E + D].set(
        jnp.eye(D, dtype=jnp.float32))

    # per-layer causal decay tensor, block-diagonal over batch
    idx = jnp.arange(BS)
    b_of = idx // seq_len
    s_of = idx % seq_len
    same_b = b_of[:, None] == b_of[None, :]
    diff = s_of[:, None] - s_of[None, :]
    mask = same_b & (diff >= 0)                                  # (BS, BS)
    diff_c = jnp.maximum(diff, 0).astype(jnp.float32)
    a_layers = params["s5_A"][:, 0, :]                           # (L, P)
    apow = jnp.where(mask[None, :, :, None],
                     a_layers[:, None, None, :] ** diff_c[None, :, :, None],
                     0.0).astype(jnp.float32)                    # (L, BS, BS, P)

    # last-time-step selector
    sel = jnp.zeros((batch, BS), jnp.float32).at[
        jnp.arange(batch), jnp.arange(batch) * seq_len + (seq_len - 1)].set(1.0)

    # packed FC heads
    w1 = params["fc_w1"]                                         # (V, C+1, H1)
    w1_s5 = jnp.transpose(w1[:, :C, :], (1, 0, 2)).reshape(C, V * H1)
    w1_cv = jnp.zeros((V, V * H1), jnp.float32)
    w2_bd = jnp.zeros((V * H1, V * H2), jnp.float32)
    w3_bd = jnp.zeros((V * H2, V), jnp.float32)
    for v in range(V):
        w1_cv = w1_cv.at[v, v * H1:(v + 1) * H1].set(w1[v, C, :])
        w2_bd = w2_bd.at[v * H1:(v + 1) * H1,
                         v * H2:(v + 1) * H2].set(params["fc_w2"][v])
        w3_bd = w3_bd.at[v * H2:(v + 1) * H2, v].set(params["fc_w3"][v, 0, :])
    b1_bd = params["fc_b1"][:, 0, :].reshape(1, V * H1)
    b2_bd = params["fc_b2"][:, 0, :].reshape(1, V * H2)
    b3_row = params["fc_b3"][:, 0, :].reshape(1, V)

    return {
        "e_ext": e_ext, "s_ext": s_ext, "apow": apow, "sel": sel,
        "s5_B": params["s5_B"], "s5_C": params["s5_C"], "s5_D": params["s5_D"],
        "s5_g": params["s5_g"], "s5_be": params["s5_be"],
        "w1_s5": w1_s5, "w1_cv": w1_cv, "b1": b1_bd,
        "w2": w2_bd, "b2": b2_bd, "w3": w3_bd, "b3": b3_row,
    }


# ----------------------------- pure-JAX reference ----------------------------
def reference_forward(params, op_x, input_signals, cur_control_values):
    embedded = jnp.take(params["emb"], op_x, axis=0)
    x = jnp.concatenate([embedded, input_signals], axis=-1)      # (B, S, C)
    L = params["s5_A"].shape[0]
    for layer in range(L):
        gamma = params["s5_g"][layer]
        beta = params["s5_be"][layer]
        mu = jnp.mean(x, axis=-1, keepdims=True)
        var = jnp.mean((x - mu) ** 2, axis=-1, keepdims=True)
        z = (x - mu) * jax.lax.rsqrt(var + LN_EPS) * gamma + beta
        bu = jnp.einsum("bsc,cp->bsp", z, params["s5_B"][layer])
        a = params["s5_A"][layer][0]                             # (P,)
        h = jnp.zeros((x.shape[0], a.shape[0]), jnp.float32)
        ys = []
        for t in range(x.shape[1]):
            h = a[None, :] * h + bu[:, t, :]
            ys.append(h)
        y = jnp.stack(ys, axis=1)                                # (B, S, P)
        ssm = jnp.einsum("bsp,pc->bsc", y, params["s5_C"][layer]) \
            + z * params["s5_D"][layer]
        x = x + jax.nn.gelu(ssm, approximate=True)
    s5_last = x[:, -1, :]
    V = cur_control_values.shape[1]
    s5_exp = jnp.broadcast_to(s5_last[:, None, :],
                              (s5_last.shape[0], V, s5_last.shape[1]))
    xin = jnp.concatenate([s5_exp, cur_control_values[..., None]], axis=-1)
    outs = []
    for v in range(V):
        xv = xin[:, v]
        h1 = jax.nn.relu(xv @ params["fc_w1"][v] + params["fc_b1"][v])
        h2 = jax.nn.relu(h1 @ params["fc_w2"][v] + params["fc_b2"][v])
        o = jnp.sum(h2 * params["fc_w3"][v], axis=-1, keepdims=True) \
            + params["fc_b3"][v]
        outs.append(o)
    return jnp.concatenate(outs, axis=-1)


# ----------------------------- parameter init --------------------------------
def init_params(key):
    keys = jax.random.split(key, 16)
    L, C, P, V = NUM_S5_LAYERS, CONCAT_DIM, STATE_DIM, NUM_CONTROL_VARIATES
    H1, H2 = FC_HIDDEN
    scale = 0.1
    a_row = jnp.linspace(0.5, 0.95, P, dtype=jnp.float32)        # stable decays
    params = {
        "emb":  scale * jax.random.normal(keys[0], (NUM_OP_MODES, EMBED_DIM),
                                          jnp.float32),
        "s5_A": jnp.broadcast_to(a_row[None, None, :], (L, 1, P)),
        "s5_B": scale * jax.random.normal(keys[1], (L, C, P), jnp.float32),
        "s5_C": scale * jax.random.normal(keys[2], (L, P, C), jnp.float32),
        "s5_D": scale * jax.random.normal(keys[3], (L, 1, C), jnp.float32),
        "s5_g": jnp.ones((L, 1, C), jnp.float32),
        "s5_be": jnp.zeros((L, 1, C), jnp.float32),
        "fc_w1": scale * jax.random.normal(keys[4], (V, FC_IN, H1), jnp.float32),
        "fc_b1": scale * jax.random.normal(keys[5], (V, 1, H1), jnp.float32),
        "fc_w2": scale * jax.random.normal(keys[6], (V, H1, H2), jnp.float32),
        "fc_b2": scale * jax.random.normal(keys[7], (V, 1, H2), jnp.float32),
        # final layer stored as (V, 1, H2) row vectors
        "fc_w3": scale * jax.random.normal(keys[8], (V, 1, H2), jnp.float32),
        "fc_b3": scale * jax.random.normal(keys[9], (V, 1, 1), jnp.float32),
    }
    return params


# ----------------------------- main ------------------------------------------
if __name__ == "__main__":
    key = jax.random.PRNGKey(0)
    k_op, k_sig, k_cv, k_par = jax.random.split(key, 4)

    op_x = jax.random.randint(k_op, (BATCH, SEQ_LEN), 0, NUM_OP_MODES,
                              dtype=jnp.int32)
    input_signals = jax.random.normal(k_sig, (BATCH, SEQ_LEN, INPUT_DIM),
                                      jnp.float32)
    cur_control_values = jax.random.normal(k_cv, (BATCH, NUM_CONTROL_VARIATES),
                                           jnp.float32)
    params = init_params(k_par)
    packed = pack_params(params, BATCH, SEQ_LEN)

    forward = jax.jit(causal_model_forward)
    out = jax.block_until_ready(
        forward(packed, op_x, input_signals, cur_control_values))

    ref = jax.block_until_ready(
        reference_forward(params, op_x, input_signals, cur_control_values))

    assert out.shape == (BATCH, NUM_CONTROL_VARIATES), out.shape
    assert np.all(np.isfinite(np.asarray(out)))
    np.testing.assert_allclose(np.asarray(out), np.asarray(ref),
                               rtol=1e-2, atol=1e-3)
    print("KERNEL_OK")
</pallas_src>

<mosaic_0001>
module attributes {stable_mosaic.version = 11 : i64} {
  func.func @causal_model_kernel(%arg0: memref<16x1xi32, #tpu.memory_space<vmem>>, %arg1: memref<16x4xf32, #tpu.memory_space<vmem>>, %arg2: memref<5x20xf32, #tpu.memory_space<vmem>>, %arg3: memref<4x20xf32, #tpu.memory_space<vmem>>, %arg4: memref<3x16x16x64xf32, #tpu.memory_space<vmem>>, %arg5: memref<3x20x64xf32, #tpu.memory_space<vmem>>, %arg6: memref<3x64x20xf32, #tpu.memory_space<vmem>>, %arg7: memref<3x1x20xf32, #tpu.memory_space<vmem>>, %arg8: memref<3x1x20xf32, #tpu.memory_space<vmem>>, %arg9: memref<3x1x20xf32, #tpu.memory_space<vmem>>, %arg10: memref<2x16xf32, #tpu.memory_space<vmem>>, %arg11: memref<2x3xf32, #tpu.memory_space<vmem>>, %arg12: memref<20x192xf32, #tpu.memory_space<vmem>>, %arg13: memref<3x192xf32, #tpu.memory_space<vmem>>, %arg14: memref<1x192xf32, #tpu.memory_space<vmem>>, %arg15: memref<192x96xf32, #tpu.memory_space<vmem>>, %arg16: memref<1x96xf32, #tpu.memory_space<vmem>>, %arg17: memref<96x3xf32, #tpu.memory_space<vmem>>, %arg18: memref<1x3xf32, #tpu.memory_space<vmem>>, %arg19: memref<2x3xf32, #tpu.memory_space<vmem>>) attributes {dimension_semantics = [], scalar_prefetch = 0 : i64, scratch_operands = 0 : i64, tpu.core_type = #tpu.core_type<tc>} {
    %0 = tpu.iota {dimensions = array<i32: 1>} : vector<16x5xi32>
    %c0 = arith.constant 0 : index
    %c0_0 = arith.constant 0 : index
    %1 = vector.load %arg0[%c0, %c0_0] : memref<16x1xi32, #tpu.memory_space<vmem>>, vector<16x1xi32>
    %2 = vector.broadcast %1 : vector<16x1xi32> to vector<16x5xi32>
    %3 = arith.cmpi eq, %2, %0 : vector<16x5xi32>
    %4 = arith.extui %3 : vector<16x5xi1> to vector<16x5xi32>
    %5 = arith.sitofp %4 : vector<16x5xi32> to vector<16x5xf32>
    %c0_1 = arith.constant 0 : index
    %c0_2 = arith.constant 0 : index
    %6 = vector.load %arg2[%c0_1, %c0_2] : memref<5x20xf32, #tpu.memory_space<vmem>>, vector<5x20xf32>
    %cst = arith.constant dense<0.000000e+00> : vector<16x20xf32>
    %7 = tpu.matmul %5, %6, %cst {dimension_numbers = #tpu.dot_dimension_numbers<[1], [0], [0], [1], [0, 0, 1, 1], [], []>} : vector<16x5xf32>, vector<5x20xf32>, vector<16x20xf32> -> vector<16x20xf32>
    %c0_3 = arith.constant 0 : index
    %c0_4 = arith.constant 0 : index
    %8 = vector.load %arg1[%c0_3, %c0_4] : memref<16x4xf32, #tpu.memory_space<vmem>>, vector<16x4xf32>
    %c0_5 = arith.constant 0 : index
    %c0_6 = arith.constant 0 : index
    %9 = vector.load %arg3[%c0_5, %c0_6] : memref<4x20xf32, #tpu.memory_space<vmem>>, vector<4x20xf32>
    %cst_7 = arith.constant dense<0.000000e+00> : vector<16x20xf32>
    %10 = tpu.matmul %8, %9, %cst_7 {dimension_numbers = #tpu.dot_dimension_numbers<[1], [0], [0], [1], [0, 0, 1, 1], [], []>} : vector<16x4xf32>, vector<4x20xf32>, vector<16x20xf32> -> vector<16x20xf32>
    %11 = arith.addf %7, %10 : vector<16x20xf32>
    %c0_8 = arith.constant 0 : index
    %c0_9 = arith.constant 0 : index
    %c0_10 = arith.constant 0 : index
    %12 = vector.load %arg8[%c0_8, %c0_9, %c0_10] : memref<3x1x20xf32, #tpu.memory_space<vmem>>, vector<1x1x20xf32>
    %13 = vector.shape_cast %12 : vector<1x1x20xf32> to vector<1x20xf32>
    %c0_11 = arith.constant 0 : index
    %c0_12 = arith.constant 0 : index
    %c0_13 = arith.constant 0 : index
    %14 = vector.load %arg9[%c0_11, %c0_12, %c0_13] : memref<3x1x20xf32, #tpu.memory_space<vmem>>, vector<1x1x20xf32>
    %15 = vector.shape_cast %14 : vector<1x1x20xf32> to vector<1x20xf32>
    %cst_14 = arith.constant dense<0.000000e+00> : vector<16xf32>
    %16 = vector.multi_reduction <add>, %11, %cst_14 [1] : vector<16x20xf32> to vector<16xf32>
    %17 = vector.shape_cast %16 : vector<16xf32> to vector<16x1xf32>
    %cst_15 = arith.constant 2.000000e+01 : f32
    %18 = vector.broadcast %cst_15 : f32 to vector<16x1xf32>
    %19 = arith.divf %17, %18 : vector<16x1xf32>
    %20 = vector.broadcast %19 : vector<16x1xf32> to vector<16x20xf32>
    %21 = arith.subf %11, %20 : vector<16x20xf32>
    %22 = arith.mulf %21, %21 : vector<16x20xf32>
    %cst_16 = arith.constant dense<0.000000e+00> : vector<16xf32>
    %23 = vector.multi_reduction <add>, %22, %cst_16 [1] : vector<16x20xf32> to vector<16xf32>
    %24 = vector.shape_cast %23 : vector<16xf32> to vector<16x1xf32>
    %cst_17 = arith.constant 2.000000e+01 : f32
    %25 = vector.broadcast %cst_17 : f32 to vector<16x1xf32>
    %26 = arith.divf %24, %25 : vector<16x1xf32>
    %27 = vector.broadcast %19 : vector<16x1xf32> to vector<16x20xf32>
    %28 = arith.subf %11, %27 : vector<16x20xf32>
    %cst_18 = arith.constant 9.99999974E-6 : f32
    %29 = vector.broadcast %cst_18 : f32 to vector<16x1xf32>
    %30 = arith.addf %26, %29 : vector<16x1xf32>
    %31 = math.rsqrt %30 : vector<16x1xf32>
    %32 = vector.broadcast %31 : vector<16x1xf32> to vector<16x20xf32>
    %33 = arith.mulf %28, %32 : vector<16x20xf32>
    %34 = vector.broadcast %13 : vector<1x20xf32> to vector<16x20xf32>
    %35 = arith.mulf %33, %34 : vector<16x20xf32>
    %36 = vector.broadcast %15 : vector<1x20xf32> to vector<16x20xf32>
    %37 = arith.addf %35, %36 : vector<16x20xf32>
    %c0_19 = arith.constant 0 : index
    %c0_20 = arith.constant 0 : index
    %c0_21 = arith.constant 0 : index
    %38 = vector.load %arg5[%c0_19, %c0_20, %c0_21] : memref<3x20x64xf32, #tpu.memory_space<vmem>>, vector<1x20x64xf32>
    %39 = vector.shape_cast %38 : vector<1x20x64xf32> to vector<20x64xf32>
    %cst_22 = arith.constant dense<0.000000e+00> : vector<16x64xf32>
    %40 = tpu.matmul %37, %39, %cst_22 {dimension_numbers = #tpu.dot_dimension_numbers<[1], [0], [0], [1], [0, 0, 1, 1], [], []>} : vector<16x20xf32>, vector<20x64xf32>, vector<16x64xf32> -> vector<16x64xf32>
    %c0_23 = arith.constant 0 : index
    %c0_24 = arith.constant 0 : index
    %c0_25 = arith.constant 0 : index
    %c0_26 = arith.constant 0 : index
    %41 = vector.load %arg4[%c0_23, %c0_24, %c0_25, %c0_26] : memref<3x16x16x64xf32, #tpu.memory_space<vmem>>, vector<1x16x16x64xf32>
    %42 = vector.shape_cast %41 : vector<1x16x16x64xf32> to vector<16x16x64xf32>
    %43 = vector.shape_cast %40 : vector<16x64xf32> to vector<1x16x64xf32>
    %44 = vector.broadcast %43 : vector<1x16x64xf32> to vector<16x16x64xf32>
    %45 = arith.mulf %42, %44 : vector<16x16x64xf32>
    %cst_27 = arith.constant dense<0.000000e+00> : vector<16x64xf32>
    %46 = vector.multi_reduction <add>, %45, %cst_27 [1] : vector<16x16x64xf32> to vector<16x64xf32>
    %c0_28 = arith.constant 0 : index
    %c0_29 = arith.constant 0 : index
    %c0_30 = arith.constant 0 : index
    %47 = vector.load %arg6[%c0_28, %c0_29, %c0_30] : memref<3x64x20xf32, #tpu.memory_space<vmem>>, vector<1x64x20xf32>
    %48 = vector.shape_cast %47 : vector<1x64x20xf32> to vector<64x20xf32>
    %cst_31 = arith.constant dense<0.000000e+00> : vector<16x20xf32>
    %49 = tpu.matmul %46, %48, %cst_31 {dimension_numbers = #tpu.dot_dimension_numbers<[1], [0], [0], [1], [0, 0, 1, 1], [], []>} : vector<16x64xf32>, vector<64x20xf32>, vector<16x20xf32> -> vector<16x20xf32>
    %c0_32 = arith.constant 0 : index
    %c0_33 = arith.constant 0 : index
    %c0_34 = arith.constant 0 : index
    %50 = vector.load %arg7[%c0_32, %c0_33, %c0_34] : memref<3x1x20xf32, #tpu.memory_space<vmem>>, vector<1x1x20xf32>
    %51 = vector.shape_cast %50 : vector<1x1x20xf32> to vector<1x20xf32>
    %52 = vector.broadcast %51 : vector<1x20xf32> to vector<16x20xf32>
    %53 = arith.mulf %37, %52 : vector<16x20xf32>
    %54 = arith.addf %49, %53 : vector<16x20xf32>
    %55 = arith.mulf %54, %54 : vector<16x20xf32>
    %56 = arith.mulf %54, %55 : vector<16x20xf32>
    %cst_35 = arith.constant 4.471500e-02 : f32
    %57 = vector.broadcast %cst_35 : f32 to vector<16x20xf32>
    %58 = arith.mulf %57, %56 : vector<16x20xf32>
    %59 = arith.addf %54, %58 : vector<16x20xf32>
    %cst_36 = arith.constant 0.797884583 : f32
    %60 = vector.broadcast %cst_36 : f32 to vector<16x20xf32>
    %61 = arith.mulf %60, %59 : vector<16x20xf32>
    %62 = math.tanh %61 : vector<16x20xf32>
    %cst_37 = arith.constant 1.000000e+00 : f32
    %63 = vector.broadcast %cst_37 : f32 to vector<16x20xf32>
    %64 = arith.addf %63, %62 : vector<16x20xf32>
    %cst_38 = arith.constant 5.000000e-01 : f32
    %65 = vector.broadcast %cst_38 : f32 to vector<16x20xf32>
    %66 = arith.mulf %65, %64 : vector<16x20xf32>
    %67 = arith.mulf %54, %66 : vector<16x20xf32>
    %68 = arith.addf %11, %67 : vector<16x20xf32>
    %c1 = arith.constant 1 : index
    %c0_39 = arith.constant 0 : index
    %c0_40 = arith.constant 0 : index
    %69 = vector.load %arg8[%c1, %c0_39, %c0_40] : memref<3x1x20xf32, #tpu.memory_space<vmem>>, vector<1x1x20xf32>
    %70 = vector.shape_cast %69 : vector<1x1x20xf32> to vector<1x20xf32>
    %c1_41 = arith.constant 1 : index
    %c0_42 = arith.constant 0 : index
    %c0_43 = arith.constant 0 : index
    %71 = vector.load %arg9[%c1_41, %c0_42, %c0_43] : memref<3x1x20xf32, #tpu.memory_space<vmem>>, vector<1x1x20xf32>
    %72 = vector.shape_cast %71 : vector<1x1x20xf32> to vector<1x20xf32>
    %cst_44 = arith.constant dense<0.000000e+00> : vector<16xf32>
    %73 = vector.multi_reduction <add>, %68, %cst_44 [1] : vector<16x20xf32> to vector<16xf32>
    %74 = vector.shape_cast %73 : vector<16xf32> to vector<16x1xf32>
    %cst_45 = arith.constant 2.000000e+01 : f32
    %75 = vector.broadcast %cst_45 : f32 to vector<16x1xf32>
    %76 = arith.divf %74, %75 : vector<16x1xf32>
    %77 = vector.broadcast %76 : vector<16x1xf32> to vector<16x20xf32>
    %78 = arith.subf %68, %77 : vector<16x20xf32>
    %79 = arith.mulf %78, %78 : vector<16x20xf32>
    %cst_46 = arith.constant dense<0.000000e+00> : vector<16xf32>
    %80 = vector.multi_reduction <add>, %79, %cst_46 [1] : vector<16x20xf32> to vector<16xf32>
    %81 = vector.shape_cast %80 : vector<16xf32> to vector<16x1xf32>
    %cst_47 = arith.constant 2.000000e+01 : f32
    %82 = vector.broadcast %cst_47 : f32 to vector<16x1xf32>
    %83 = arith.divf %81, %82 : vector<16x1xf32>
    %84 = vector.broadcast %76 : vector<16x1xf32> to vector<16x20xf32>
    %85 = arith.subf %68, %84 : vector<16x20xf32>
    %cst_48 = arith.constant 9.99999974E-6 : f32
    %86 = vector.broadcast %cst_48 : f32 to vector<16x1xf32>
    %87 = arith.addf %83, %86 : vector<16x1xf32>
    %88 = math.rsqrt %87 : vector<16x1xf32>
    %89 = vector.broadcast %88 : vector<16x1xf32> to vector<16x20xf32>
    %90 = arith.mulf %85, %89 : vector<16x20xf32>
    %91 = vector.broadcast %70 : vector<1x20xf32> to vector<16x20xf32>
    %92 = arith.mulf %90, %91 : vector<16x20xf32>
    %93 = vector.broadcast %72 : vector<1x20xf32> to vector<16x20xf32>
    %94 = arith.addf %92, %93 : vector<16x20xf32>
    %c1_49 = arith.constant 1 : index
    %c0_50 = arith.constant 0 : index
    %c0_51 = arith.constant 0 : index
    %95 = vector.load %arg5[%c1_49, %c0_50, %c0_51] : memref<3x20x64xf32, #tpu.memory_space<vmem>>, vector<1x20x64xf32>
    %96 = vector.shape_cast %95 : vector<1x20x64xf32> to vector<20x64xf32>
    %cst_52 = arith.constant dense<0.000000e+00> : vector<16x64xf32>
    %97 = tpu.matmul %94, %96, %cst_52 {dimension_numbers = #tpu.dot_dimension_numbers<[1], [0], [0], [1], [0, 0, 1, 1], [], []>} : vector<16x20xf32>, vector<20x64xf32>, vector<16x64xf32> -> vector<16x64xf32>
    %c1_53 = arith.constant 1 : index
    %c0_54 = arith.constant 0 : index
    %c0_55 = arith.constant 0 : index
    %c0_56 = arith.constant 0 : index
    %98 = vector.load %arg4[%c1_53, %c0_54, %c0_55, %c0_56] : memref<3x16x16x64xf32, #tpu.memory_space<vmem>>, vector<1x16x16x64xf32>
    %99 = vector.shape_cast %98 : vector<1x16x16x64xf32> to vector<16x16x64xf32>
    %100 = vector.shape_cast %97 : vector<16x64xf32> to vector<1x16x64xf32>
    %101 = vector.broadcast %100 : vector<1x16x64xf32> to vector<16x16x64xf32>
    %102 = arith.mulf %99, %101 : vector<16x16x64xf32>
    %cst_57 = arith.constant dense<0.000000e+00> : vector<16x64xf32>
    %103 = vector.multi_reduction <add>, %102, %cst_57 [1] : vector<16x16x64xf32> to vector<16x64xf32>
    %c1_58 = arith.constant 1 : index
    %c0_59 = arith.constant 0 : index
    %c0_60 = arith.constant 0 : index
    %104 = vector.load %arg6[%c1_58, %c0_59, %c0_60] : memref<3x64x20xf32, #tpu.memory_space<vmem>>, vector<1x64x20xf32>
    %105 = vector.shape_cast %104 : vector<1x64x20xf32> to vector<64x20xf32>
    %cst_61 = arith.constant dense<0.000000e+00> : vector<16x20xf32>
    %106 = tpu.matmul %103, %105, %cst_61 {dimension_numbers = #tpu.dot_dimension_numbers<[1], [0], [0], [1], [0, 0, 1, 1], [], []>} : vector<16x64xf32>, vector<64x20xf32>, vector<16x20xf32> -> vector<16x20xf32>
    %c1_62 = arith.constant 1 : index
    %c0_63 = arith.constant 0 : index
    %c0_64 = arith.constant 0 : index
    %107 = vector.load %arg7[%c1_62, %c0_63, %c0_64] : memref<3x1x20xf32, #tpu.memory_space<vmem>>, vector<1x1x20xf32>
    %108 = vector.shape_cast %107 : vector<1x1x20xf32> to vector<1x20xf32>
    %109 = vector.broadcast %108 : vector<1x20xf32> to vector<16x20xf32>
    %110 = arith.mulf %94, %109 : vector<16x20xf32>
    %111 = arith.addf %106, %110 : vector<16x20xf32>
    %112 = arith.mulf %111, %111 : vector<16x20xf32>
    %113 = arith.mulf %111, %112 : vector<16x20xf32>
    %cst_65 = arith.constant 4.471500e-02 : f32
    %114 = vector.broadcast %cst_65 : f32 to vector<16x20xf32>
    %115 = arith.mulf %114, %113 : vector<16x20xf32>
    %116 = arith.addf %111, %115 : vector<16x20xf32>
    %cst_66 = arith.constant 0.797884583 : f32
    %117 = vector.broadcast %cst_66 : f32 to vector<16x20xf32>
    %118 = arith.mulf %117, %116 : vector<16x20xf32>
    %119 = math.tanh %118 : vector<16x20xf32>
    %cst_67 = arith.constant 1.000000e+00 : f32
    %120 = vector.broadcast %cst_67 : f32 to vector<16x20xf32>
    %121 = arith.addf %120, %119 : vector<16x20xf32>
    %cst_68 = arith.constant 5.000000e-01 : f32
    %122 = vector.broadcast %cst_68 : f32 to vector<16x20xf32>
    %123 = arith.mulf %122, %121 : vector<16x20xf32>
    %124 = arith.mulf %111, %123 : vector<16x20xf32>
    %125 = arith.addf %68, %124 : vector<16x20xf32>
    %c2 = arith.constant 2 : index
    %c0_69 = arith.constant 0 : index
    %c0_70 = arith.constant 0 : index
    %126 = vector.load %arg8[%c2, %c0_69, %c0_70] : memref<3x1x20xf32, #tpu.memory_space<vmem>>, vector<1x1x20xf32>
    %127 = vector.shape_cast %126 : vector<1x1x20xf32> to vector<1x20xf32>
    %c2_71 = arith.constant 2 : index
    %c0_72 = arith.constant 0 : index
    %c0_73 = arith.constant 0 : index
    %128 = vector.load %arg9[%c2_71, %c0_72, %c0_73] : memref<3x1x20xf32, #tpu.memory_space<vmem>>, vector<1x1x20xf32>
    %129 = vector.shape_cast %128 : vector<1x1x20xf32> to vector<1x20xf32>
    %cst_74 = arith.constant dense<0.000000e+00> : vector<16xf32>
    %130 = vector.multi_reduction <add>, %125, %cst_74 [1] : vector<16x20xf32> to vector<16xf32>
    %131 = vector.shape_cast %130 : vector<16xf32> to vector<16x1xf32>
    %cst_75 = arith.constant 2.000000e+01 : f32
    %132 = vector.broadcast %cst_75 : f32 to vector<16x1xf32>
    %133 = arith.divf %131, %132 : vector<16x1xf32>
    %134 = vector.broadcast %133 : vector<16x1xf32> to vector<16x20xf32>
    %135 = arith.subf %125, %134 : vector<16x20xf32>
    %136 = arith.mulf %135, %135 : vector<16x20xf32>
    %cst_76 = arith.constant dense<0.000000e+00> : vector<16xf32>
    %137 = vector.multi_reduction <add>, %136, %cst_76 [1] : vector<16x20xf32> to vector<16xf32>
    %138 = vector.shape_cast %137 : vector<16xf32> to vector<16x1xf32>
    %cst_77 = arith.constant 2.000000e+01 : f32
    %139 = vector.broadcast %cst_77 : f32 to vector<16x1xf32>
    %140 = arith.divf %138, %139 : vector<16x1xf32>
    %141 = vector.broadcast %133 : vector<16x1xf32> to vector<16x20xf32>
    %142 = arith.subf %125, %141 : vector<16x20xf32>
    %cst_78 = arith.constant 9.99999974E-6 : f32
    %143 = vector.broadcast %cst_78 : f32 to vector<16x1xf32>
    %144 = arith.addf %140, %143 : vector<16x1xf32>
    %145 = math.rsqrt %144 : vector<16x1xf32>
    %146 = vector.broadcast %145 : vector<16x1xf32> to vector<16x20xf32>
    %147 = arith.mulf %142, %146 : vector<16x20xf32>
    %148 = vector.broadcast %127 : vector<1x20xf32> to vector<16x20xf32>
    %149 = arith.mulf %147, %148 : vector<16x20xf32>
    %150 = vector.broadcast %129 : vector<1x20xf32> to vector<16x20xf32>
    %151 = arith.addf %149, %150 : vector<16x20xf32>
    %c2_79 = arith.constant 2 : index
    %c0_80 = arith.constant 0 : index
    %c0_81 = arith.constant 0 : index
    %152 = vector.load %arg5[%c2_79, %c0_80, %c0_81] : memref<3x20x64xf32, #tpu.memory_space<vmem>>, vector<1x20x64xf32>
    %153 = vector.shape_cast %152 : vector<1x20x64xf32> to vector<20x64xf32>
    %cst_82 = arith.constant dense<0.000000e+00> : vector<16x64xf32>
    %154 = tpu.matmul %151, %153, %cst_82 {dimension_numbers = #tpu.dot_dimension_numbers<[1], [0], [0], [1], [0, 0, 1, 1], [], []>} : vector<16x20xf32>, vector<20x64xf32>, vector<16x64xf32> -> vector<16x64xf32>
    %c2_83 = arith.constant 2 : index
    %c0_84 = arith.constant 0 : index
    %c0_85 = arith.constant 0 : index
    %c0_86 = arith.constant 0 : index
    %155 = vector.load %arg4[%c2_83, %c0_84, %c0_85, %c0_86] : memref<3x16x16x64xf32, #tpu.memory_space<vmem>>, vector<1x16x16x64xf32>
    %156 = vector.shape_cast %155 : vector<1x16x16x64xf32> to vector<16x16x64xf32>
    %157 = vector.shape_cast %154 : vector<16x64xf32> to vector<1x16x64xf32>
    %158 = vector.broadcast %157 : vector<1x16x64xf32> to vector<16x16x64xf32>
    %159 = arith.mulf %156, %158 : vector<16x16x64xf32>
    %cst_87 = arith.constant dense<0.000000e+00> : vector<16x64xf32>
    %160 = vector.multi_reduction <add>, %159, %cst_87 [1] : vector<16x16x64xf32> to vector<16x64xf32>
    %c2_88 = arith.constant 2 : index
    %c0_89 = arith.constant 0 : index
    %c0_90 = arith.constant 0 : index
    %161 = vector.load %arg6[%c2_88, %c0_89, %c0_90] : memref<3x64x20xf32, #tpu.memory_space<vmem>>, vector<1x64x20xf32>
    %162 = vector.shape_cast %161 : vector<1x64x20xf32> to vector<64x20xf32>
    %cst_91 = arith.constant dense<0.000000e+00> : vector<16x20xf32>
    %163 = tpu.matmul %160, %162, %cst_91 {dimension_numbers = #tpu.dot_dimension_numbers<[1], [0], [0], [1], [0, 0, 1, 1], [], []>} : vector<16x64xf32>, vector<64x20xf32>, vector<16x20xf32> -> vector<16x20xf32>
    %c2_92 = arith.constant 2 : index
    %c0_93 = arith.constant 0 : index
    %c0_94 = arith.constant 0 : index
    %164 = vector.load %arg7[%c2_92, %c0_93, %c0_94] : memref<3x1x20xf32, #tpu.memory_space<vmem>>, vector<1x1x20xf32>
    %165 = vector.shape_cast %164 : vector<1x1x20xf32> to vector<1x20xf32>
    %166 = vector.broadcast %165 : vector<1x20xf32> to vector<16x20xf32>
    %167 = arith.mulf %151, %166 : vector<16x20xf32>
    %168 = arith.addf %163, %167 : vector<16x20xf32>
    %169 = arith.mulf %168, %168 : vector<16x20xf32>
    %170 = arith.mulf %168, %169 : vector<16x20xf32>
    %cst_95 = arith.constant 4.471500e-02 : f32
    %171 = vector.broadcast %cst_95 : f32 to vector<16x20xf32>
    %172 = arith.mulf %171, %170 : vector<16x20xf32>
    %173 = arith.addf %168, %172 : vector<16x20xf32>
    %cst_96 = arith.constant 0.797884583 : f32
    %174 = vector.broadcast %cst_96 : f32 to vector<16x20xf32>
    %175 = arith.mulf %174, %173 : vector<16x20xf32>
    %176 = math.tanh %175 : vector<16x20xf32>
    %cst_97 = arith.constant 1.000000e+00 : f32
    %177 = vector.broadcast %cst_97 : f32 to vector<16x20xf32>
    %178 = arith.addf %177, %176 : vector<16x20xf32>
    %cst_98 = arith.constant 5.000000e-01 : f32
    %179 = vector.broadcast %cst_98 : f32 to vector<16x20xf32>
    %180 = arith.mulf %179, %178 : vector<16x20xf32>
    %181 = arith.mulf %168, %180 : vector<16x20xf32>
    %182 = arith.addf %125, %181 : vector<16x20xf32>
    %c0_99 = arith.constant 0 : index
    %c0_100 = arith.constant 0 : index
    %183 = vector.load %arg10[%c0_99, %c0_100] : memref<2x16xf32, #tpu.memory_space<vmem>>, vector<2x16xf32>
    %cst_101 = arith.constant dense<0.000000e+00> : vector<2x20xf32>
    %184 = tpu.matmul %183, %182, %cst_101 {dimension_numbers = #tpu.dot_dimension_numbers<[1], [0], [0], [1], [0, 0, 1, 1], [], []>} : vector<2x16xf32>, vector<16x20xf32>, vector<2x20xf32> -> vector<2x20xf32>
    %c0_102 = arith.constant 0 : index
    %c0_103 = arith.constant 0 : index
    %185 = vector.load %arg12[%c0_102, %c0_103] : memref<20x192xf32, #tpu.memory_space<vmem>>, vector<20x192xf32>
    %cst_104 = arith.constant dense<0.000000e+00> : vector<2x192xf32>
    %186 = tpu.matmul %184, %185, %cst_104 {dimension_numbers = #tpu.dot_dimension_numbers<[1], [0], [0], [1], [0, 0, 1, 1], [], []>} : vector<2x20xf32>, vector<20x192xf32>, vector<2x192xf32> -> vector<2x192xf32>
    %c0_105 = arith.constant 0 : index
    %c0_106 = arith.constant 0 : index
    %187 = vector.load %arg11[%c0_105, %c0_106] : memref<2x3xf32, #tpu.memory_space<vmem>>, vector<2x3xf32>
    %c0_107 = arith.constant 0 : index
    %c0_108 = arith.constant 0 : index
    %188 = vector.load %arg13[%c0_107, %c0_108] : memref<3x192xf32, #tpu.memory_space<vmem>>, vector<3x192xf32>
    %cst_109 = arith.constant dense<0.000000e+00> : vector<2x192xf32>
    %189 = tpu.matmul %187, %188, %cst_109 {dimension_numbers = #tpu.dot_dimension_numbers<[1], [0], [0], [1], [0, 0, 1, 1], [], []>} : vector<2x3xf32>, vector<3x192xf32>, vector<2x192xf32> -> vector<2x192xf32>
    %190 = arith.addf %186, %189 : vector<2x192xf32>
    %c0_110 = arith.constant 0 : index
    %c0_111 = arith.constant 0 : index
    %191 = vector.load %arg14[%c0_110, %c0_111] : memref<1x192xf32, #tpu.memory_space<vmem>>, vector<1x192xf32>
    %192 = vector.broadcast %191 : vector<1x192xf32> to vector<2x192xf32>
    %193 = arith.addf %190, %192 : vector<2x192xf32>
    %cst_112 = arith.constant 0.000000e+00 : f32
    %194 = vector.broadcast %cst_112 : f32 to vector<2x192xf32>
    %195 = arith.maximumf %193, %194 : vector<2x192xf32>
    %c0_113 = arith.constant 0 : index
    %c0_114 = arith.constant 0 : index
    %196 = vector.load %arg15[%c0_113, %c0_114] : memref<192x96xf32, #tpu.memory_space<vmem>>, vector<192x96xf32>
    %cst_115 = arith.constant dense<0.000000e+00> : vector<2x96xf32>
    %197 = tpu.matmul %195, %196, %cst_115 {dimension_numbers = #tpu.dot_dimension_numbers<[1], [0], [0], [1], [0, 0, 1, 1], [], []>} : vector<2x192xf32>, vector<192x96xf32>, vector<2x96xf32> -> vector<2x96xf32>
    %c0_116 = arith.constant 0 : index
    %c0_117 = arith.constant 0 : index
    %198 = vector.load %arg16[%c0_116, %c0_117] : memref<1x96xf32, #tpu.memory_space<vmem>>, vector<1x96xf32>
    %199 = vector.broadcast %198 : vector<1x96xf32> to vector<2x96xf32>
    %200 = arith.addf %197, %199 : vector<2x96xf32>
    %cst_118 = arith.constant 0.000000e+00 : f32
    %201 = vector.broadcast %cst_118 : f32 to vector<2x96xf32>
    %202 = arith.maximumf %200, %201 : vector<2x96xf32>
    %c0_119 = arith.constant 0 : index
    %c0_120 = arith.constant 0 : index
    %203 = vector.load %arg17[%c0_119, %c0_120] : memref<96x3xf32, #tpu.memory_space<vmem>>, vector<96x3xf32>
    %cst_121 = arith.constant dense<0.000000e+00> : vector<2x3xf32>
    %204 = tpu.matmul %202, %203, %cst_121 {dimension_numbers = #tpu.dot_dimension_numbers<[1], [0], [0], [1], [0, 0, 1, 1], [], []>} : vector<2x96xf32>, vector<96x3xf32>, vector<2x3xf32> -> vector<2x3xf32>
    %c0_122 = arith.constant 0 : index
    %c0_123 = arith.constant 0 : index
    %205 = vector.load %arg18[%c0_122, %c0_123] : memref<1x3xf32, #tpu.memory_space<vmem>>, vector<1x3xf32>
    %206 = vector.broadcast %205 : vector<1x3xf32> to vector<2x3xf32>
    %207 = arith.addf %204, %206 : vector<2x3xf32>
    %c0_124 = arith.constant 0 : index
    %c0_125 = arith.constant 0 : index
    %208 = vector.load %arg19[%c0_124, %c0_125] : memref<2x3xf32, #tpu.memory_space<vmem>>, vector<2x3xf32>
    tpu.vector_store %arg19[%c0_124, %c0_125], %207 {strides = array<i32>} : memref<2x3xf32, #tpu.memory_space<vmem>>, vector<2x3xf32>,
    return
  }
}

</mosaic_0001>

<llo_original>
// kernel: causal_model_forward.1
$region0: #{causal_model_forward.1}
  #allocation0 [shape = 'u32[]', space=smem, size = 0x4, offset = 0x4, fixed_abs, tag = 'smem constant byte address 0x4 - core index']
  #allocation1 [shape = 'u32[72,128]{1,0:T(1,128)}', space=vmem, size = 0x9000, scoped, tag = 'internal scratch']
  %s0 = inlined_call_operand.vmem [shape: s32[16,1], index: 0, kind: input, shape index: {}]
  %s1 = inlined_call_operand.vmem [shape: f32[16,4], index: 1, kind: input, shape index: {}]
  %s2 = inlined_call_operand.vmem [shape: f32[5,20], index: 2, kind: input, shape index: {}]
  %s3 = inlined_call_operand.vmem [shape: f32[4,20], index: 3, kind: input, shape index: {}]
  %s4 = inlined_call_operand.hbm [shape: f32[3,16,16,64], index: 4, kind: input, shape index: {}]
  %s5 = inlined_call_operand.vmem [shape: f32[3,20,64], index: 5, kind: input, shape index: {}]
  %s6 = inlined_call_operand.vmem [shape: f32[3,64,20], index: 6, kind: input, shape index: {}]
  %s7 = inlined_call_operand.hbm [shape: f32[3,1,20], index: 7, kind: input, shape index: {}]
  %s8 = inlined_call_operand.hbm [shape: f32[3,1,20], index: 8, kind: input, shape index: {}]
  %s9 = inlined_call_operand.hbm [shape: f32[3,1,20], index: 9, kind: input, shape index: {}]
  %s10 = inlined_call_operand.vmem [shape: f32[2,16], index: 10, kind: input, shape index: {}]
  %s11 = inlined_call_operand.vmem [shape: f32[2,3], index: 11, kind: input, shape index: {}]
  %s12 = inlined_call_operand.vmem [shape: f32[20,192], index: 12, kind: input, shape index: {}]
  %s13 = inlined_call_operand.hbm [shape: f32[3,192], index: 13, kind: input, shape index: {}]
  %s14 = inlined_call_operand.hbm [shape: f32[1,192], index: 14, kind: input, shape index: {}]
  %s15 = inlined_call_operand.vmem [shape: f32[192,96], index: 15, kind: input, shape index: {}]
  %s16 = inlined_call_operand.hbm [shape: f32[1,96], index: 16, kind: input, shape index: {}]
  %s17 = inlined_call_operand.vmem [shape: f32[96,3], index: 17, kind: input, shape index: {}]
  %s18 = inlined_call_operand.hbm [shape: f32[1,3], index: 18, kind: input, shape index: {}]
  %s19 = inlined_call_operand.hbm [shape: f32[2,3], index: 19, kind: output, shape index: {}]
  %s20 = sld [smem:[#allocation0]]
  $region118: #{causal_model_forward.1} parent=0
    _
  %s22 = ssub.s32 1, %s20
  %s23 = scalar_select 0, %s22, %s20
  $region1: #{causal_model_forward.1} parent=0
    #allocation2 [shape = 'u8[393216]{0}', space=vmem, size = 0x60000, scoped, tag = 'input window, operand 4, single buffered']
    #allocation3 [shape = 's32[1]{0}', space=sflag, size = 0x4, scoped, tag = 'scoped memory for causal_model_forward.1']
    #allocation4 [shape = 's32[1]{0}', space=sflag, size = 0x4, scoped, tag = 'scoped memory for causal_model_forward.1']
    #allocation5 [shape = 'u8[1536]{0}', space=vmem, size = 0x800, scoped, tag = 'input window, operand 7, single buffered']
    #allocation6 [shape = 's32[1]{0}', space=sflag, size = 0x4, scoped, tag = 'scoped memory for causal_model_forward.1']
    #allocation7 [shape = 'u8[1536]{0}', space=vmem, size = 0x800, scoped, tag = 'input window, operand 8, single buffered']
    #allocation8 [shape = 'u8[1536]{0}', space=vmem, size = 0x800, scoped, tag = 'input window, operand 9, single buffered']
    #allocation9 [shape = 's32[1]{0}', space=sflag, size = 0x4, scoped, tag = 'scoped memory for causal_model_forward.1']
    #allocation10 [shape = 'u8[4096]{0}', space=vmem, size = 0x1000, scoped, tag = 'input window, operand 13, single buffered']
    #allocation11 [shape = 'u8[1024]{0}', space=vmem, size = 0x400, scoped, tag = 'input window, operand 14, single buffered']
    #allocation12 [shape = 's32[1]{0}', space=sflag, size = 0x4, scoped, tag = 'scoped memory for causal_model_forward.1']
    #allocation13 [shape = 'u8[512]{0}', space=vmem, size = 0x400, scoped, tag = 'input window, operand 16, single buffered']
    #allocation14 [shape = 'u8[512]{0}', space=vmem, size = 0x400, scoped, tag = 'input window, operand 18, single buffered']
    #allocation15 [shape = 's32[1]{0}', space=sflag, size = 0x4, scoped, tag = 'scoped memory for causal_model_forward.1']
    #allocation16 [shape = 'u8[1024]{0}', space=vmem, size = 0x400, scoped, tag = 'output window, operand 0, single buffered']
    %24 = vsyncpa [#allocation3], 0
    %25 = vsyncpa [#allocation6], 0
    %26 = vsyncpa [#allocation9], 0
    %27 = vsyncpa [#allocation12], 0
    %28 = vsyncpa [#allocation15], 0
    %29 = vsyncpa [#allocation4], 0
    // Predicated region
    $region2: #{causal_model_forward.1} parent=1 // pred_check
      _
    $region3: #{causal_model_forward.1} parent=1 // pred_check_branch
      %31 = sbr.rel (0) target = $region5
    $region4: #{causal_model_forward.1} parent=1 // pred_region
      _
    $region5: #{causal_model_forward.1} parent=1 // pred_fallthru
      _
    // Predicated region
    $region6: #{causal_model_forward.1} parent=1 // pred_check
      _
    $region7: #{causal_model_forward.1} parent=1 // pred_check_branch
      %33 = sbr.rel (0) target = $region9
    $region8: #{causal_model_forward.1} parent=1 // pred_region
      _
    $region9: #{causal_model_forward.1} parent=1 // pred_fallthru
      _
    // Predicated region
    $region10: #{causal_model_forward.1} parent=1 // pred_check
      _
    $region11: #{causal_model_forward.1} parent=1 // pred_check_branch
      %35 = sbr.rel (0) target = $region13
    $region12: #{causal_model_forward.1} parent=1 // pred_region
      _
    $region13: #{causal_model_forward.1} parent=1 // pred_fallthru
      _
    // Predicated region
    $region14: #{causal_model_forward.1} parent=1 // pred_check
      _
    $region15: #{causal_model_forward.1} parent=1 // pred_check_branch
      %37 = sbr.rel (0) target = $region17
    $region16: #{causal_model_forward.1} parent=1 // pred_region
      _
    $region17: #{causal_model_forward.1} parent=1 // pred_fallthru
      _
    // Predicated region
    $region18: #{causal_model_forward.1} parent=1 // pred_check
      _
    $region19: #{causal_model_forward.1} parent=1 // pred_check_branch
      %39 = sbr.rel (0) target = $region21
    $region20: #{causal_model_forward.1} parent=1 // pred_region
      %41 = vsyncadd [#allocation3], 0
      %s42 = sshll.u32 %s4, 4
      %s43 = int_to_ptr.hbm [resolvable:$true] %s42
      %s44 = sshll.u32 [#allocation2], 4
      %s45 = int_to_ptr.vmem [resolvable:$true] %s44
      %50 = dma.hbm_to_vmem [thread:$0]  %s43, 12288, %s45, [#allocation3], 128, 128, 8
    $region21: #{causal_model_forward.1} parent=1 // pred_fallthru
      _
    // Predicated region
    $region22: #{causal_model_forward.1} parent=1 // pred_check
      _
    $region23: #{causal_model_forward.1} parent=1 // pred_check_branch
      %52 = sbr.rel (0) target = $region25
    $region24: #{causal_model_forward.1} parent=1 // pred_region
      _
    $region25: #{causal_model_forward.1} parent=1 // pred_fallthru
      _
    // Predicated region
    $region26: #{causal_model_forward.1} parent=1 // pred_check
      _
    $region27: #{causal_model_forward.1} parent=1 // pred_check_branch
      %54 = sbr.rel (0) target = $region29
    $region28: #{causal_model_forward.1} parent=1 // pred_region
      _
    $region29: #{causal_model_forward.1} parent=1 // pred_fallthru
      _
    // Predicated region
    $region30: #{causal_model_forward.1} parent=1 // pred_check
      _
    $region31: #{causal_model_forward.1} parent=1 // pred_check_branch
      %56 = sbr.rel (0) target = $region33
    $region32: #{causal_model_forward.1} parent=1 // pred_region
      %58 = vsyncadd [#allocation6], 0
      %s59 = sshll.u32 %s7, 4
      %s60 = int_to_ptr.hbm [resolvable:$true] %s59
      %s61 = sshll.u32 [#allocation5], 4
      %s62 = int_to_ptr.vmem [resolvable:$true] %s61
      %67 = dma.hbm_to_vmem [thread:$0]  %s60, 48, %s62, [#allocation6], 16, 16, 1
    $region33: #{causal_model_forward.1} parent=1 // pred_fallthru
      _
    // Predicated region
    $region34: #{causal_model_forward.1} parent=1 // pred_check
      _
    $region35: #{causal_model_forward.1} parent=1 // pred_check_branch
      %69 = sbr.rel (0) target = $region37
    $region36: #{causal_model_forward.1} parent=1 // pred_region
      %71 = vsyncadd [#allocation6], 0
      %s72 = sshll.u32 %s8, 4
      %s73 = int_to_ptr.hbm [resolvable:$true] %s72
      %s74 = sshll.u32 [#allocation7], 4
      %s75 = int_to_ptr.vmem [resolvable:$true] %s74
      %80 = dma.hbm_to_vmem [thread:$0]  %s73, 48, %s75, [#allocation6], 16, 16, 1
    $region37: #{causal_model_forward.1} parent=1 // pred_fallthru
      _
    // Predicated region
    $region38: #{causal_model_forward.1} parent=1 // pred_check
      _
    $region39: #{causal_model_forward.1} parent=1 // pred_check_branch
      %82 = sbr.rel (0) target = $region41
    $region40: #{causal_model_forward.1} parent=1 // pred_region
      %84 = vsyncadd [#allocation9], 0
      %s85 = sshll.u32 %s9, 4
      %s86 = int_to_ptr.hbm [resolvable:$true] %s85
      %s87 = sshll.u32 [#allocation8], 4
      %s88 = int_to_ptr.vmem [resolvable:$true] %s87
      %93 = dma.hbm_to_vmem [thread:$0]  %s86, 48, %s88, [#allocation9], 16, 16, 1
    $region41: #{causal_model_forward.1} parent=1 // pred_fallthru
      _
    // Predicated region
    $region42: #{causal_model_forward.1} parent=1 // pred_check
      _
    $region43: #{causal_model_forward.1} parent=1 // pred_check_branch
      %95 = sbr.rel (0) target = $region45
    $region44: #{causal_model_forward.1} parent=1 // pred_region
      _
    $region45: #{causal_model_forward.1} parent=1 // pred_fallthru
      _
    // Predicated region
    $region46: #{causal_model_forward.1} parent=1 // pred_check
      _
    $region47: #{causal_model_forward.1} parent=1 // pred_check_branch
      %97 = sbr.rel (0) target = $region49
    $region48: #{causal_model_forward.1} parent=1 // pred_region
      _
    $region49: #{causal_model_forward.1} parent=1 // pred_fallthru
      _
    // Predicated region
    $region50: #{causal_model_forward.1} parent=1 // pred_check
      _
    $region51: #{causal_model_forward.1} parent=1 // pred_check_branch
      %99 = sbr.rel (0) target = $region53
    $region52: #{causal_model_forward.1} parent=1 // pred_region
      _
    $region53: #{causal_model_forward.1} parent=1 // pred_fallthru
      _
    // Predicated region
    $region54: #{causal_model_forward.1} parent=1 // pred_check
      _
    $region55: #{causal_model_forward.1} parent=1 // pred_check_branch
      %101 = sbr.rel (0) target = $region57
    $region56: #{causal_model_forward.1} parent=1 // pred_region
      %103 = vsyncadd [#allocation9], 0
      %s105 = sshll.u32 %s13, 4
      %s106 = int_to_ptr.hbm [resolvable:$true] %s105
      %s107 = sshll.u32 [#allocation10], 4
      %s108 = int_to_ptr.vmem [resolvable:$true] %s107
      %110 = dma.hbm_to_vmem [thread:$0]  %s106, 128, %s108, [#allocation9]
    $region57: #{causal_model_forward.1} parent=1 // pred_fallthru
      _
    // Predicated region
    $region58: #{causal_model_forward.1} parent=1 // pred_check
      _
    $region59: #{causal_model_forward.1} parent=1 // pred_check_branch
      %112 = sbr.rel (0) target = $region61
    $region60: #{causal_model_forward.1} parent=1 // pred_region
      %114 = vsyncadd [#allocation12], 0
      %s116 = sshll.u32 %s14, 4
      %s117 = int_to_ptr.hbm [resolvable:$true] %s116
      %s118 = sshll.u32 [#allocation11], 4
      %s119 = int_to_ptr.vmem [resolvable:$true] %s118
      %121 = dma.hbm_to_vmem [thread:$0]  %s117, 32, %s119, [#allocation12]
    $region61: #{causal_model_forward.1} parent=1 // pred_fallthru
      _
    // Predicated region
    $region62: #{causal_model_forward.1} parent=1 // pred_check
      _
    $region63: #{causal_model_forward.1} parent=1 // pred_check_branch
      %123 = sbr.rel (0) target = $region65
    $region64: #{causal_model_forward.1} parent=1 // pred_region
      _
    $region65: #{causal_model_forward.1} parent=1 // pred_fallthru
      _
    // Predicated region
    $region66: #{causal_model_forward.1} parent=1 // pred_check
      _
    $region67: #{causal_model_forward.1} parent=1 // pred_check_branch
      %125 = sbr.rel (0) target = $region69
    $region68: #{causal_model_forward.1} parent=1 // pred_region
      %127 = vsyncadd [#allocation12], 0
      %s129 = sshll.u32 %s16, 4
      %s130 = int_to_ptr.hbm [resolvable:$true] %s129
      %s131 = sshll.u32 [#allocation13], 4
      %s132 = int_to_ptr.vmem [resolvable:$true] %s131
      %134 = dma.hbm_to_vmem [thread:$0]  %s130, 16, %s132, [#allocation12]
    $region69: #{causal_model_forward.1} parent=1 // pred_fallthru
      _
    // Predicated region
    $region70: #{causal_model_forward.1} parent=1 // pred_check
      _
    $region71: #{causal_model_forward.1} parent=1 // pred_check_branch
      %136 = sbr.rel (0) target = $region73
    $region72: #{causal_model_forward.1} parent=1 // pred_region
      _
    $region73: #{causal_model_forward.1} parent=1 // pred_fallthru
      _
    // Predicated region
    $region74: #{causal_model_forward.1} parent=1 // pred_check
      _
    $region75: #{causal_model_forward.1} parent=1 // pred_check_branch
      %138 = sbr.rel (0) target = $region77
    $region76: #{causal_model_forward.1} parent=1 // pred_region
      %140 = vsyncadd [#allocation15], 0
      %s142 = sshll.u32 %s18, 4
      %s143 = int_to_ptr.hbm [resolvable:$true] %s142
      %s144 = sshll.u32 [#allocation14], 4
      %s145 = int_to_ptr.vmem [resolvable:$true] %s144
      %147 = dma.hbm_to_vmem [thread:$0]  %s143, 16, %s145, [#allocation15]
    $region77: #{causal_model_forward.1} parent=1 // pred_fallthru
      _
    // Predicated region
    $region78: #{causal_model_forward.1} parent=1 // pred_check
      _
    $region79: #{causal_model_forward.1} parent=1 // pred_check_branch
      %149 = sbr.rel (0) target = $region81
    $region80: #{causal_model_forward.1} parent=1 // pred_region
      %151 = dma.done [#allocation3], 12288
    $region81: #{causal_model_forward.1} parent=1 // pred_fallthru
      _
    // Predicated region
    $region82: #{causal_model_forward.1} parent=1 // pred_check
      _
    $region83: #{causal_model_forward.1} parent=1 // pred_check_branch
      %153 = sbr.rel (0) target = $region85
    $region84: #{causal_model_forward.1} parent=1 // pred_region
      %155 = dma.done [#allocation6], 48
    $region85: #{causal_model_forward.1} parent=1 // pred_fallthru
      _
    // Predicated region
    $region86: #{causal_model_forward.1} parent=1 // pred_check
      _
    $region87: #{causal_model_forward.1} parent=1 // pred_check_branch
      %157 = sbr.rel (0) target = $region89
    $region88: #{causal_model_forward.1} parent=1 // pred_region
      %159 = dma.done [#allocation6], 48
    $region89: #{causal_model_forward.1} parent=1 // pred_fallthru
      _
    // Predicated region
    $region90: #{causal_model_forward.1} parent=1 // pred_check
      _
    $region91: #{causal_model_forward.1} parent=1 // pred_check_branch
      %161 = sbr.rel (0) target = $region93
    $region92: #{causal_model_forward.1} parent=1 // pred_region
      %163 = dma.done [#allocation9], 48
    $region93: #{causal_model_forward.1} parent=1 // pred_fallthru
      _
    // Predicated region
    $region94: #{causal_model_forward.1} parent=1 // pred_check
      _
    $region95: #{causal_model_forward.1} parent=1 // pred_check_branch
      %165 = sbr.rel (0) target = $region97
    $region96: #{causal_model_forward.1} parent=1 // pred_region
      %167 = dma.done [#allocation9], 128
    $region97: #{causal_model_forward.1} parent=1 // pred_fallthru
      _
    // Predicated region
    $region98: #{causal_model_forward.1} parent=1 // pred_check
      _
    $region99: #{causal_model_forward.1} parent=1 // pred_check_branch
      %169 = sbr.rel (0) target = $region101
    $region100: #{causal_model_forward.1} parent=1 // pred_region
      %171 = dma.done [#allocation12], 32
    $region101: #{causal_model_forward.1} parent=1 // pred_fallthru
      _
    // Predicated region
    $region102: #{causal_model_forward.1} parent=1 // pred_check
      _
    $region103: #{causal_model_forward.1} parent=1 // pred_check_branch
      %173 = sbr.rel (0) target = $region105
    $region104: #{causal_model_forward.1} parent=1 // pred_region
      %175 = dma.done [#allocation12], 16
    $region105: #{causal_model_forward.1} parent=1 // pred_fallthru
      _
    // Predicated region
    $region106: #{causal_model_forward.1} parent=1 // pred_check
      _
    $region107: #{causal_model_forward.1} parent=1 // pred_check_branch
      %177 = sbr.rel (0) target = $region109
    $region108: #{causal_model_forward.1} parent=1 // pred_region
      %179 = dma.done [#allocation15], 16
    $region109: #{causal_model_forward.1} parent=1 // pred_fallthru
      _
    %v180 = vlaneseq
    %v181 = vand.u32 %v180, 127
    %v182 = vld [vmem:[%s0] sm:$0xff]
    %v183 = vld [vmem:[%s0 + $0x8] sm:$0xff]
    %184 = vset.pattern.permute.xlu0 0
    %185 = vperm.xlu0 %184, %v182
    %v186 = vpop.permute.xlu0 %185
    %187 = vset.pattern.permute.xlu0 0
    %188 = vperm.xlu0 %187, %v183
    %v189 = vpop.permute.xlu0 %188
    %vm190 = vcmp.eq.s32.totalorder %v186, %v181
    %vm191 = vcmp.eq.s32.totalorder %v189, %v181
    %v192 = vsel %vm190, 1, 0
    %v193 = vsel %vm191, 1, 0
    %v194 = vcvt.s32.f32 %v192
    %v195 = vcvt.s32.f32 %v193
    %v196 = vld [vmem:[%s2] sm:$0x1f]
    %v197 = vld [vmem:[%s1] sm:$0xff]
    %v198 = vld [vmem:[%s1 + $0x8] sm:$0xff]
    %v199 = vld [vmem:[%s3] sm:$0xf]
    %vm200 = vcmask 31744
    %v202 = vsel %vm200, %v197, 0
    %v205 = vsel %vm200, %v198, 0
    %vm207 = vcmask 1043456
    %v209 = vsel %vm207, %v199, 0
    %211 = vmatpush.msra.mxu0 0.0
    %212 = vmatpush.msra.mxu0 0.0
    %213 = vmatpush.msra.mxu0 0.0
    %214 = vmatpush.msra.mxu0 0.0
    %215 = vmatpush.msra.mxu0 0.0
    %216 = vmatpush.msra.mxu0 0.0
    %217 = vmatpush.msra.mxu0 0.0
    %218 = vmatpush.msra.mxu0 0.0
    %219 = vmatpush.msra.mxu0 0.0
    %220 = vmatpush.msra.mxu0 0.0
    %221 = vmatpush.msra.mxu0 0.0
    %222 = vmatpush.msra.mxu0 0.0
    %223 = vmatpush.msra.mxu0 0.0
    %224 = vmatpush.msra.mxu0 0.0
    %225 = vmatpush.msra.mxu0 0.0
    %226 = vmatpush.msra.mxu0 %v209
    %227 = vmatmul.f32.gmra.mxu0 %v202
    %v228 = vpop.f32.mrf.mxu0
    %v229 = vadd.f32 0.0, %v228
    %230 = vmatmul.f32.gmra.mxu0 %v205
    %v231 = vpop.f32.mrf.mxu0
    %v232 = vadd.f32 0.0, %v231
    %233 = vdwg.mxu0
    %vm234 = vcmask 39936
    %v236 = vsel %vm234, %v194, 0
    %v239 = vsel %vm234, %v195, 0
    %vm241 = vcmask 1044480
    %v243 = vsel %vm241, %v196, 0
    %245 = vmatpush.msra.mxu0 0.0
    %246 = vmatpush.msra.mxu0 0.0
    %247 = vmatpush.msra.mxu0 0.0
    %248 = vmatpush.msra.mxu0 0.0
    %249 = vmatpush.msra.mxu0 0.0
    %250 = vmatpush.msra.mxu0 0.0
    %251 = vmatpush.msra.mxu0 0.0
    %252 = vmatpush.msra.mxu0 0.0
    %253 = vmatpush.msra.mxu0 0.0
    %254 = vmatpush.msra.mxu0 0.0
    %255 = vmatpush.msra.mxu0 0.0
    %256 = vmatpush.msra.mxu0 0.0
    %257 = vmatpush.msra.mxu0 0.0
    %258 = vmatpush.msra.mxu0 0.0
    %259 = vmatpush.msra.mxu0 0.0
    %260 = vmatpush.msra.mxu0 %v243
    %261 = vmatmul.f32.gmra.mxu0 %v236
    %v262 = vpop.f32.mrf.mxu0
    %v263 = vadd.f32 %v229, %v262
    %264 = vmatmul.f32.gmra.mxu0 %v239
    %v265 = vpop.f32.mrf.mxu0
    %v266 = vadd.f32 %v232, %v265
    %267 = vdwg.mxu0
    %v268 = vld [vmem:[#allocation7] sm:$0x1]
    %v269 = vld [vmem:[#allocation8] sm:$0x1]
    %vm270 = vcmask 162816
    %v271 = vsel %vm270, %v263, 0.0
    %272 = vadd.xlane.f32.xlu0 %v271
    %v273 = vpop.xlane.xlu0 %272
    %v274 = vsel %vm270, %v266, 0.0
    %275 = vadd.xlane.f32.xlu0 %v274
    %v276 = vpop.xlane.xlu0 %275
    %v277 = vrcp.pop 20.0
    %v278 = vmul.f32 20.0, %v277
    %v279 = vsub.f32 1.0, %v278
    %v280 = vmul.f32 %v277, %v279
    %v281 = vadd.f32 %v277, %v280
    %vm282 = vweird.f32 %v277
    %v283 = vsel %vm282, %v277, %v281
    %v284 = vmul.f32 %v273, %v283
    %v285 = vmul.f32 %v276, %v283
    %v286 = vsub.f32 %v263, %v284
    %v287 = vsub.f32 %v266, %v285
    %v288 = vmul.f32 %v286, %v286
    %v289 = vmul.f32 %v287, %v287
    %v290 = vsel %vm270, %v288, 0.0
    %291 = vadd.xlane.f32.xlu0 %v290
    %v292 = vpop.xlane.xlu0 %291
    %v293 = vsel %vm270, %v289, 0.0
    %294 = vadd.xlane.f32.xlu0 %v293
    %v295 = vpop.xlane.xlu0 %294
    %v296 = vmul.f32 %v292, %v283
    %v297 = vmul.f32 %v295, %v283
    %v298 = vadd.f32 %v296, 1e-05
    %v299 = vadd.f32 %v297, 1e-05
    %v300 = vrsqrt.pop %v298
    %v301 = vmul.f32 %v300, %v298
    %v302 = vmul.f32 %v301, %v300
    %v303 = vmul.f32 0.5, %v302
    %v304 = vsub.f32 1.5, %v303
    %v305 = vmul.f32 %v300, %v304
    %vm306 = vweird.f32 %v298
    %vm307 = vweird.f32 %v300
    %vm308 = vmor %vm306, %vm307
    %v309 = vsel %vm308, %v300, %v305
    %v310 = vrsqrt.pop %v299
    %v311 = vmul.f32 %v310, %v299
    %v312 = vmul.f32 %v311, %v310
    %v313 = vmul.f32 0.5, %v312
    %v314 = vsub.f32 1.5, %v313
    %v315 = vmul.f32 %v310, %v314
    %vm316 = vweird.f32 %v299
    %vm317 = vweird.f32 %v310
    %vm318 = vmor %vm316, %vm317
    %v319 = vsel %vm318, %v310, %v315
    %v320 = vmul.f32 %v286, %v309
    %v321 = vmul.f32 %v287, %v319
    %v323 = vperm.slane %v268, 0
    %v325 = vmul.f32 %v320, %v323
    %v326 = vmul.f32 %v321, %v323
    %v328 = vperm.slane %v269, 0
    %v330 = vadd.f32 %v325, %v328
    %v331 = vadd.f32 %v326, %v328
    %v332 = vld [vmem:[%s5] sm:$0xff]
    %v333 = vld [vmem:[%s5 + $0x8] sm:$0xff]
    %v334 = vld [vmem:[%s5 + $0x10] sm:$0xf]
    %v336 = vsel %vm270, %v330, 0
    %v339 = vsel %vm270, %v331, 0
    %v342 = vsel %vm207, %v334, 0
    %344 = vmatpush.msra.mxu0 0.0
    %345 = vmatpush.msra.mxu0 0.0
    %346 = vmatpush.msra.mxu0 0.0
    %347 = vmatpush.msra.mxu0 0.0
    %348 = vmatpush.msra.mxu0 0.0
    %349 = vmatpush.msra.mxu0 0.0
    %350 = vmatpush.msra.mxu0 0.0
    %351 = vmatpush.msra.mxu0 0.0
    %352 = vmatpush.msra.mxu0 0.0
    %353 = vmatpush.msra.mxu0 0.0
    %354 = vmatpush.msra.mxu0 0.0
    %355 = vmatpush.msra.mxu0 0.0
    %356 = vmatpush.msra.mxu0 0.0
    %357 = vmatpush.msra.mxu0 %v342
    %358 = vmatpush.msra.mxu0 %v333
    %359 = vmatpush.msra.mxu0 %v332
    %360 = vmatmul.f32.gmra.mxu0 %v336
    %v361 = vpop.f32.mrf.mxu0
    %v362 = vadd.f32 0.0, %v361
    %363 = vmatmul.f32.gmra.mxu0 %v339
    %v364 = vpop.f32.mrf.mxu0
    %v365 = vadd.f32 0.0, %v364
    %366 = vdwg.mxu0
    %v367 = vld [vmem:[#allocation2] sm:$0xff]
    %v368 = vld [vmem:[#allocation2 + $0x8] sm:$0xff]
    %v369 = vld [vmem:[#allocation2 + $0x10] sm:$0xff]
    %v370 = vld [vmem:[#allocation2 + $0x18] sm:$0xff]
    %v371 = vld [vmem:[#allocation2 + $0x20] sm:$0xff]
    %v372 = vld [vmem:[#allocation2 + $0x28] sm:$0xff]
    %v373 = vld [vmem:[#allocation2 + $0x30] sm:$0xff]
    %v374 = vld [vmem:[#allocation2 + $0x38] sm:$0xff]
    %v375 = vld [vmem:[#allocation2 + $0x40] sm:$0xff]
    %v376 = vld [vmem:[#allocation2 + $0x48] sm:$0xff]
    %v377 = vld [vmem:[#allocation2 + $0x50] sm:$0xff]
    %v378 = vld [vmem:[#allocation2 + $0x58] sm:$0xff]
    %v379 = vld [vmem:[#allocation2 + $0x60] sm:$0xff]
    %v380 = vld [vmem:[#allocation2 + $0x68] sm:$0xff]
    %v381 = vld [vmem:[#allocation2 + $0x70] sm:$0xff]
    %v382 = vld [vmem:[#allocation2 + $0x78] sm:$0xff]
    %v383 = vld [vmem:[#allocation2 + $0x80] sm:$0xff]
    %v384 = vld [vmem:[#allocation2 + $0x88] sm:$0xff]
    %v385 = vld [vmem:[#allocation2 + $0x90] sm:$0xff]
    %v386 = vld [vmem:[#allocation2 + $0x98] sm:$0xff]
    %v387 = vld [vmem:[#allocation2 + $0xa0] sm:$0xff]
    %v388 = vld [vmem:[#allocation2 + $0xa8] sm:$0xff]
    %v389 = vld [vmem:[#allocation2 + $0xb0] sm:$0xff]
    %v390 = vld [vmem:[#allocation2 + $0xb8] sm:$0xff]
    %v391 = vld [vmem:[#allocation2 + $0xc0] sm:$0xff]
    %v392 = vld [vmem:[#allocation2 + $0xc8] sm:$0xff]
    %v393 = vld [vmem:[#allocation2 + $0xd0] sm:$0xff]
    %v394 = vld [vmem:[#allocation2 + $0xd8] sm:$0xff]
    %v395 = vld [vmem:[#allocation2 + $0xe0] sm:$0xff]
    %v396 = vld [vmem:[#allocation2 + $0xe8] sm:$0xff]
    %v397 = vld [vmem:[#allocation2 + $0xf0] sm:$0xff]
    %v398 = vld [vmem:[#allocation2 + $0xf8] sm:$0xff]
    %v399 = vmul.f32 %v367, %v362
    %v400 = vmul.f32 %v368, %v365
    %v401 = vmul.f32 %v369, %v362
    %v402 = vmul.f32 %v370, %v365
    %v403 = vmul.f32 %v371, %v362
    %v404 = vmul.f32 %v372, %v365
    %v405 = vmul.f32 %v373, %v362
    %v406 = vmul.f32 %v374, %v365
    %v407 = vmul.f32 %v375, %v362
    %v408 = vmul.f32 %v376, %v365
    %v409 = vmul.f32 %v377, %v362
    %v410 = vmul.f32 %v378, %v365
    %v411 = vmul.f32 %v379, %v362
    %v412 = vmul.f32 %v380, %v365
    %v413 = vmul.f32 %v381, %v362
    %v414 = vmul.f32 %v382, %v365
    %v415 = vmul.f32 %v383, %v362
    %v416 = vmul.f32 %v384, %v365
    %v417 = vmul.f32 %v385, %v362
    %v418 = vmul.f32 %v386, %v365
    %v419 = vmul.f32 %v387, %v362
    %v420 = vmul.f32 %v388, %v365
    %v421 = vmul.f32 %v389, %v362
    %v422 = vmul.f32 %v390, %v365
    %v423 = vmul.f32 %v391, %v362
    %v424 = vmul.f32 %v392, %v365
    %v425 = vmul.f32 %v393, %v362
    %v426 = vmul.f32 %v394, %v365
    %v427 = vmul.f32 %v395, %v362
    %v428 = vmul.f32 %v396, %v365
    %v429 = vmul.f32 %v397, %v362
    %v430 = vmul.f32 %v398, %v365
    %vm431 = vcmask 523264
    %v432 = vsel %vm431, %v399, 0.0
    %v433 = vsel %vm431, %v400, 0.0
    %v434 = vadd.f32 %v432, %v433
    %v435 = vrot.slane %v434, 4
    %v436 = vadd.f32 %v434, %v435
    %v437 = vrot.slane %v436, 2
    %v438 = vadd.f32 %v436, %v437
    %v439 = vrot.slane %v438, 1
    %v440 = vadd.f32 %v438, %v439
    %v441 = vsel %vm431, %v401, 0.0
    %v442 = vsel %vm431, %v402, 0.0
    %v443 = vadd.f32 %v441, %v442
    %v444 = vrot.slane %v443, 4
    %v445 = vadd.f32 %v443, %v444
    %v446 = vrot.slane %v445, 2
    %v447 = vadd.f32 %v445, %v446
    %v448 = vrot.slane %v447, 1
    %v449 = vadd.f32 %v447, %v448
    %v450 = vsel %vm431, %v403, 0.0
    %v451 = vsel %vm431, %v404, 0.0
    %v452 = vadd.f32 %v450, %v451
    %v453 = vrot.slane %v452, 4
    %v454 = vadd.f32 %v452, %v453
    %v455 = vrot.slane %v454, 2
    %v456 = vadd.f32 %v454, %v455
    %v457 = vrot.slane %v456, 1
    %v458 = vadd.f32 %v456, %v457
    %v459 = vsel %vm431, %v405, 0.0
    %v460 = vsel %vm431, %v406, 0.0
    %v461 = vadd.f32 %v459, %v460
    %v462 = vrot.slane %v461, 4
    %v463 = vadd.f32 %v461, %v462
    %v464 = vrot.slane %v463, 2
    %v465 = vadd.f32 %v463, %v464
    %v466 = vrot.slane %v465, 1
    %v467 = vadd.f32 %v465, %v466
    %v468 = vsel %vm431, %v407, 0.0
    %v469 = vsel %vm431, %v408, 0.0
    %v470 = vadd.f32 %v468, %v469
    %v471 = vrot.slane %v470, 4
    %v472 = vadd.f32 %v470, %v471
    %v473 = vrot.slane %v472, 2
    %v474 = vadd.f32 %v472, %v473
    %v475 = vrot.slane %v474, 1
    %v476 = vadd.f32 %v474, %v475
    %v477 = vsel %vm431, %v409, 0.0
    %v478 = vsel %vm431, %v410, 0.0
    %v479 = vadd.f32 %v477, %v478
    %v480 = vrot.slane %v479, 4
    %v481 = vadd.f32 %v479, %v480
    %v482 = vrot.slane %v481, 2
    %v483 = vadd.f32 %v481, %v482
    %v484 = vrot.slane %v483, 1
    %v485 = vadd.f32 %v483, %v484
    %v486 = vsel %vm431, %v411, 0.0
    %v487 = vsel %vm431, %v412, 0.0
    %v488 = vadd.f32 %v486, %v487
    %v489 = vrot.slane %v488, 4
    %v490 = vadd.f32 %v488, %v489
    %v491 = vrot.slane %v490, 2
    %v492 = vadd.f32 %v490, %v491
    %v493 = vrot.slane %v492, 1
    %v494 = vadd.f32 %v492, %v493
    %v495 = vsel %vm431, %v413, 0.0
    %v496 = vsel %vm431, %v414, 0.0
    %v497 = vadd.f32 %v495, %v496
    %v498 = vrot.slane %v497, 4
    %v499 = vadd.f32 %v497, %v498
    %v500 = vrot.slane %v499, 2
    %v501 = vadd.f32 %v499, %v500
    %v502 = vrot.slane %v501, 1
    %v503 = vadd.f32 %v501, %v502
    %v504 = vsel %vm431, %v415, 0.0
    %v505 = vsel %vm431, %v416, 0.0
    %v506 = vadd.f32 %v504, %v505
    %v507 = vrot.slane %v506, 4
    %v508 = vadd.f32 %v506, %v507
    %v509 = vrot.slane %v508, 2
    %v510 = vadd.f32 %v508, %v509
    %v511 = vrot.slane %v510, 1
    %v512 = vadd.f32 %v510, %v511
    %v513 = vsel %vm431, %v417, 0.0
    %v514 = vsel %vm431, %v418, 0.0
    %v515 = vadd.f32 %v513, %v514
    %v516 = vrot.slane %v515, 4
    %v517 = vadd.f32 %v515, %v516
    %v518 = vrot.slane %v517, 2
    %v519 = vadd.f32 %v517, %v518
    %v520 = vrot.slane %v519, 1
    %v521 = vadd.f32 %v519, %v520
    %v522 = vsel %vm431, %v419, 0.0
    %v523 = vsel %vm431, %v420, 0.0
    %v524 = vadd.f32 %v522, %v523
    %v525 = vrot.slane %v524, 4
    %v526 = vadd.f32 %v524, %v525
    %v527 = vrot.slane %v526, 2
    %v528 = vadd.f32 %v526, %v527
    %v529 = vrot.slane %v528, 1
    %v530 = vadd.f32 %v528, %v529
    %v531 = vsel %vm431, %v421, 0.0
    %v532 = vsel %vm431, %v422, 0.0
    %v533 = vadd.f32 %v531, %v532
    %v534 = vrot.slane %v533, 4
    %v535 = vadd.f32 %v533, %v534
    %v536 = vrot.slane %v535, 2
    %v537 = vadd.f32 %v535, %v536
    %v538 = vrot.slane %v537, 1
    %v539 = vadd.f32 %v537, %v538
    %v540 = vsel %vm431, %v423, 0.0
    %v541 = vsel %vm431, %v424, 0.0
    %v542 = vadd.f32 %v540, %v541
    %v543 = vrot.slane %v542, 4
    %v544 = vadd.f32 %v542, %v543
    %v545 = vrot.slane %v544, 2
    %v546 = vadd.f32 %v544, %v545
    %v547 = vrot.slane %v546, 1
    %v548 = vadd.f32 %v546, %v547
    %v549 = vsel %vm431, %v425, 0.0
    %v550 = vsel %vm431, %v426, 0.0
    %v551 = vadd.f32 %v549, %v550
    %v552 = vrot.slane %v551, 4
    %v553 = vadd.f32 %v551, %v552
    %v554 = vrot.slane %v553, 2
    %v555 = vadd.f32 %v553, %v554
    %v556 = vrot.slane %v555, 1
    %v557 = vadd.f32 %v555, %v556
    %v558 = vsel %vm431, %v427, 0.0
    %v559 = vsel %vm431, %v428, 0.0
    %v560 = vadd.f32 %v558, %v559
    %v561 = vrot.slane %v560, 4
    %v562 = vadd.f32 %v560, %v561
    %v563 = vrot.slane %v562, 2
    %v564 = vadd.f32 %v562, %v563
    %v565 = vrot.slane %v564, 1
    %v566 = vadd.f32 %v564, %v565
    %v567 = vsel %vm431, %v429, 0.0
    %v568 = vsel %vm431, %v430, 0.0
    %v569 = vadd.f32 %v567, %v568
    %v570 = vrot.slane %v569, 4
    %v571 = vadd.f32 %v569, %v570
    %v572 = vrot.slane %v571, 2
    %v573 = vadd.f32 %v571, %v572
    %v574 = vrot.slane %v573, 1
    %v575 = vadd.f32 %v573, %v574
    %v576 = vld [vmem:[%s6] sm:$0xff]
    %v577 = vld [vmem:[%s6 + $0x8] sm:$0xff]
    %v578 = vld [vmem:[%s6 + $0x10] sm:$0xff]
    %v579 = vld [vmem:[%s6 + $0x18] sm:$0xff]
    %v580 = vld [vmem:[%s6 + $0x20] sm:$0xff]
    %v581 = vld [vmem:[%s6 + $0x28] sm:$0xff]
    %v582 = vld [vmem:[%s6 + $0x30] sm:$0xff]
    %v583 = vld [vmem:[%s6 + $0x38] sm:$0xff]
    %v584 = vld [vmem:[#allocation5] sm:$0x1]
    %v586 = vperm.slane %v584, 0
    %v588 = vmul.f32 %v330, %v586
    %v589 = vmul.f32 %v331, %v586
    %vm606 = vcmask 1041409
    %v607 = vsel %vm606, %v449, %v440
    %vm608 = vcmask 1042434
    %v609 = vsel %vm608, %v458, %v607
    %vm610 = vcmask 1043459
    %v611 = vsel %vm610, %v467, %v609
    %vm612 = vcmask 1044484
    %v613 = vsel %vm612, %v476, %v611
    %vm614 = vcmask 1045509
    %v615 = vsel %vm614, %v485, %v613
    %vm616 = vcmask 1046534
    %v617 = vsel %vm616, %v494, %v615
    %vm618 = vcmask 1047559
    %v619 = vsel %vm618, %v503, %v617
    %v620 = vsel %vm606, %v521, %v512
    %v621 = vsel %vm608, %v530, %v620
    %v622 = vsel %vm610, %v539, %v621
    %v623 = vsel %vm612, %v548, %v622
    %v624 = vsel %vm614, %v557, %v623
    %v625 = vsel %vm616, %v566, %v624
    %v626 = vsel %vm618, %v575, %v625
    %v627 = vsel %vm431, %v619, 0
    %v629 = vsel %vm431, %v626, 0
    %631 = vmatpush.msra.mxu0 0.0
    %632 = vmatpush.msra.mxu0 0.0
    %633 = vmatpush.msra.mxu0 0.0
    %634 = vmatpush.msra.mxu0 0.0
    %635 = vmatpush.msra.mxu0 0.0
    %636 = vmatpush.msra.mxu0 0.0
    %637 = vmatpush.msra.mxu0 0.0
    %638 = vmatpush.msra.mxu0 0.0
    %639 = vmatpush.msra.mxu0 %v583
    %640 = vmatpush.msra.mxu0 %v582
    %641 = vmatpush.msra.mxu0 %v581
    %642 = vmatpush.msra.mxu0 %v580
    %643 = vmatpush.msra.mxu0 %v579
    %644 = vmatpush.msra.mxu0 %v578
    %645 = vmatpush.msra.mxu0 %v577
    %646 = vmatpush.msra.mxu0 %v576
    %647 = vmatmul.f32.gmra.mxu0 %v627
    %v648 = vpop.f32.mrf.mxu0
    %v649 = vadd.f32 %v588, %v648
    %650 = vmatmul.f32.gmra.mxu0 %v629
    %v651 = vpop.f32.mrf.mxu0
    %v652 = vadd.f32 %v589, %v651
    %653 = vdwg.mxu0
    %v654 = vmul.f32 %v649, %v649
    %v655 = vmul.f32 %v652, %v652
    %v656 = vmul.f32 %v649, %v654
    %v657 = vmul.f32 %v652, %v655
    %v658 = vmul.f32 %v656, 0.044715
    %v659 = vmul.f32 %v657, 0.044715
    %v660 = vadd.f32 %v649, %v658
    %v661 = vadd.f32 %v652, %v659
    %v662 = vmul.f32 %v660, 0.7978846
    %v663 = vmul.f32 %v661, 0.7978846
    %v664 = vtanh.pop %v662
    %v665 = vtanh.pop %v663
    %v666 = vadd.f32 %v664, 1.0
    %v667 = vadd.f32 %v665, 1.0
    %v668 = vmul.f32 %v666, 0.5
    %v669 = vmul.f32 %v667, 0.5
    %v670 = vmul.f32 %v649, %v668
    %v671 = vmul.f32 %v652, %v669
    %v672 = vadd.f32 %v263, %v670
    %v673 = vadd.f32 %v266, %v671
    %s674 = scalar_lea.vmem [#allocation7], 1
    %v675 = vld [vmem:[%s674] sm:$0x1]
    %s676 = scalar_lea.vmem [#allocation8], 1
    %v677 = vld [vmem:[%s676] sm:$0x1]
    %v678 = vsel %vm270, %v672, 0.0
    %679 = vadd.xlane.f32.xlu0 %v678
    %v680 = vpop.xlane.xlu0 %679
    %v681 = vsel %vm270, %v673, 0.0
    %682 = vadd.xlane.f32.xlu0 %v681
    %v683 = vpop.xlane.xlu0 %682
    %v684 = vmul.f32 %v680, %v283
    %v685 = vmul.f32 %v683, %v283
    %v686 = vsub.f32 %v672, %v684
    %v687 = vsub.f32 %v673, %v685
    %v688 = vmul.f32 %v686, %v686
    %v689 = vmul.f32 %v687, %v687
    %v690 = vsel %vm270, %v688, 0.0
    %691 = vadd.xlane.f32.xlu0 %v690
    %v692 = vpop.xlane.xlu0 %691
    %v693 = vsel %vm270, %v689, 0.0
    %694 = vadd.xlane.f32.xlu0 %v693
    %v695 = vpop.xlane.xlu0 %694
    %v696 = vmul.f32 %v692, %v283
    %v697 = vmul.f32 %v695, %v283
    %v698 = vadd.f32 %v696, 1e-05
    %v699 = vadd.f32 %v697, 1e-05
    %v700 = vrsqrt.pop %v698
    %v701 = vmul.f32 %v700, %v698
    %v702 = vmul.f32 %v701, %v700
    %v703 = vmul.f32 0.5, %v702
    %v704 = vsub.f32 1.5, %v703
    %v705 = vmul.f32 %v700, %v704
    %vm706 = vweird.f32 %v698
    %vm707 = vweird.f32 %v700
    %vm708 = vmor %vm706, %vm707
    %v709 = vsel %vm708, %v700, %v705
    %v710 = vrsqrt.pop %v699
    %v711 = vmul.f32 %v710, %v699
    %v712 = vmul.f32 %v711, %v710
    %v713 = vmul.f32 0.5, %v712
    %v714 = vsub.f32 1.5, %v713
    %v715 = vmul.f32 %v710, %v714
    %vm716 = vweird.f32 %v699
    %vm717 = vweird.f32 %v710
    %vm718 = vmor %vm716, %vm717
    %v719 = vsel %vm718, %v710, %v715
    %v720 = vmul.f32 %v686, %v709
    %v721 = vmul.f32 %v687, %v719
    %v723 = vperm.slane %v675, 0
    %v725 = vmul.f32 %v720, %v723
    %v726 = vmul.f32 %v721, %v723
    %v728 = vperm.slane %v677, 0
    %v730 = vadd.f32 %v725, %v728
    %v731 = vadd.f32 %v726, %v728
    %s732 = scalar_lea.vmem %s5, 24
    %v733 = vld [vmem:[%s732] sm:$0xff]
    %v734 = vld [vmem:[%s732 + $0x8] sm:$0xff]
    %v735 = vld [vmem:[%s732 + $0x10] sm:$0xf]
    %v737 = vsel %vm270, %v730, 0
    %v740 = vsel %vm270, %v731, 0
    %v743 = vsel %vm207, %v735, 0
    %745 = vmatpush.msra.mxu0 0.0
    %746 = vmatpush.msra.mxu0 0.0
    %747 = vmatpush.msra.mxu0 0.0
    %748 = vmatpush.msra.mxu0 0.0
    %749 = vmatpush.msra.mxu0 0.0
    %750 = vmatpush.msra.mxu0 0.0
    %751 = vmatpush.msra.mxu0 0.0
    %752 = vmatpush.msra.mxu0 0.0
    %753 = vmatpush.msra.mxu0 0.0
    %754 = vmatpush.msra.mxu0 0.0
    %755 = vmatpush.msra.mxu0 0.0
    %756 = vmatpush.msra.mxu0 0.0
    %757 = vmatpush.msra.mxu0 0.0
    %758 = vmatpush.msra.mxu0 %v743
    %759 = vmatpush.msra.mxu0 %v734
    %760 = vmatpush.msra.mxu0 %v733
    %761 = vmatmul.f32.gmra.mxu0 %v737
    %v762 = vpop.f32.mrf.mxu0
    %v763 = vadd.f32 0.0, %v762
    %764 = vmatmul.f32.gmra.mxu0 %v740
    %v765 = vpop.f32.mrf.mxu0
    %v766 = vadd.f32 0.0, %v765
    %767 = vdwg.mxu0
    %s768 = scalar_lea.vmem [#allocation2], 256
    %v769 = vld [vmem:[%s768] sm:$0xff]
    %v770 = vld [vmem:[%s768 + $0x8] sm:$0xff]
    %v771 = vld [vmem:[%s768 + $0x10] sm:$0xff]
    %v772 = vld [vmem:[%s768 + $0x18] sm:$0xff]
    %v773 = vld [vmem:[%s768 + $0x20] sm:$0xff]
    %v774 = vld [vmem:[%s768 + $0x28] sm:$0xff]
    %v775 = vld [vmem:[%s768 + $0x30] sm:$0xff]
    %v776 = vld [vmem:[%s768 + $0x38] sm:$0xff]
    %v777 = vld [vmem:[%s768 + $0x40] sm:$0xff]
    %v778 = vld [vmem:[%s768 + $0x48] sm:$0xff]
    %v779 = vld [vmem:[%s768 + $0x50] sm:$0xff]
    %v780 = vld [vmem:[%s768 + $0x58] sm:$0xff]
    %v781 = vld [vmem:[%s768 + $0x60] sm:$0xff]
    %v782 = vld [vmem:[%s768 + $0x68] sm:$0xff]
    %v783 = vld [vmem:[%s768 + $0x70] sm:$0xff]
    %v784 = vld [vmem:[%s768 + $0x78] sm:$0xff]
    %v785 = vld [vmem:[%s768 + $0x80] sm:$0xff]
    %v786 = vld [vmem:[%s768 + $0x88] sm:$0xff]
    %v787 = vld [vmem:[%s768 + $0x90] sm:$0xff]
    %v788 = vld [vmem:[%s768 + $0x98] sm:$0xff]
    %v789 = vld [vmem:[%s768 + $0xa0] sm:$0xff]
    %v790 = vld [vmem:[%s768 + $0xa8] sm:$0xff]
    %v791 = vld [vmem:[%s768 + $0xb0] sm:$0xff]
    %v792 = vld [vmem:[%s768 + $0xb8] sm:$0xff]
    %v793 = vld [vmem:[%s768 + $0xc0] sm:$0xff]
    %v794 = vld [vmem:[%s768 + $0xc8] sm:$0xff]
    %v795 = vld [vmem:[%s768 + $0xd0] sm:$0xff]
    %v796 = vld [vmem:[%s768 + $0xd8] sm:$0xff]
    %v797 = vld [vmem:[%s768 + $0xe0] sm:$0xff]
    %v798 = vld [vmem:[%s768 + $0xe8] sm:$0xff]
    %v799 = vld [vmem:[%s768 + $0xf0] sm:$0xff]
    %v800 = vld [vmem:[%s768 + $0xf8] sm:$0xff]
    %v801 = vmul.f32 %v769, %v763
    %v802 = vmul.f32 %v770, %v766
    %v803 = vmul.f32 %v771, %v763
    %v804 = vmul.f32 %v772, %v766
    %v805 = vmul.f32 %v773, %v763
    %v806 = vmul.f32 %v774, %v766
    %v807 = vmul.f32 %v775, %v763
    %v808 = vmul.f32 %v776, %v766
    %v809 = vmul.f32 %v777, %v763
    %v810 = vmul.f32 %v778, %v766
    %v811 = vmul.f32 %v779, %v763
    %v812 = vmul.f32 %v780, %v766
    %v813 = vmul.f32 %v781, %v763
    %v814 = vmul.f32 %v782, %v766
    %v815 = vmul.f32 %v783, %v763
    %v816 = vmul.f32 %v784, %v766
    %v817 = vmul.f32 %v785, %v763
    %v818 = vmul.f32 %v786, %v766
    %v819 = vmul.f32 %v787, %v763
    %v820 = vmul.f32 %v788, %v766
    %v821 = vmul.f32 %v789, %v763
    %v822 = vmul.f32 %v790, %v766
    %v823 = vmul.f32 %v791, %v763
    %v824 = vmul.f32 %v792, %v766
    %v825 = vmul.f32 %v793, %v763
    %v826 = vmul.f32 %v794, %v766
    %v827 = vmul.f32 %v795, %v763
    %v828 = vmul.f32 %v796, %v766
    %v829 = vmul.f32 %v797, %v763
    %v830 = vmul.f32 %v798, %v766
    %v831 = vmul.f32 %v799, %v763
    %v832 = vmul.f32 %v800, %v766
    %v833 = vsel %vm431, %v801, 0.0
    %v834 = vsel %vm431, %v802, 0.0
    %v835 = vadd.f32 %v833, %v834
    %v836 = vrot.slane %v835, 4
    %v837 = vadd.f32 %v835, %v836
    %v838 = vrot.slane %v837, 2
    %v839 = vadd.f32 %v837, %v838
    %v840 = vrot.slane %v839, 1
    %v841 = vadd.f32 %v839, %v840
    %v842 = vsel %vm431, %v803, 0.0
    %v843 = vsel %vm431, %v804, 0.0
    %v844 = vadd.f32 %v842, %v843
    %v845 = vrot.slane %v844, 4
    %v846 = vadd.f32 %v844, %v845
    %v847 = vrot.slane %v846, 2
    %v848 = vadd.f32 %v846, %v847
    %v849 = vrot.slane %v848, 1
    %v850 = vadd.f32 %v848, %v849
    %v851 = vsel %vm431, %v805, 0.0
    %v852 = vsel %vm431, %v806, 0.0
    %v853 = vadd.f32 %v851, %v852
    %v854 = vrot.slane %v853, 4
    %v855 = vadd.f32 %v853, %v854
    %v856 = vrot.slane %v855, 2
    %v857 = vadd.f32 %v855, %v856
    %v858 = vrot.slane %v857, 1
    %v859 = vadd.f32 %v857, %v858
    %v860 = vsel %vm431, %v807, 0.0
    %v861 = vsel %vm431, %v808, 0.0
    %v862 = vadd.f32 %v860, %v861
    %v863 = vrot.slane %v862, 4
    %v864 = vadd.f32 %v862, %v863
    %v865 = vrot.slane %v864, 2
    %v866 = vadd.f32 %v864, %v865
    %v867 = vrot.slane %v866, 1
    %v868 = vadd.f32 %v866, %v867
    %v869 = vsel %vm431, %v809, 0.0
    %v870 = vsel %vm431, %v810, 0.0
    %v871 = vadd.f32 %v869, %v870
    %v872 = vrot.slane %v871, 4
    %v873 = vadd.f32 %v871, %v872
    %v874 = vrot.slane %v873, 2
    %v875 = vadd.f32 %v873, %v874
    %v876 = vrot.slane %v875, 1
    %v877 = vadd.f32 %v875, %v876
    %v878 = vsel %vm431, %v811, 0.0
    %v879 = vsel %vm431, %v812, 0.0
    %v880 = vadd.f32 %v878, %v879
    %v881 = vrot.slane %v880, 4
    %v882 = vadd.f32 %v880, %v881
    %v883 = vrot.slane %v882, 2
    %v884 = vadd.f32 %v882, %v883
    %v885 = vrot.slane %v884, 1
    %v886 = vadd.f32 %v884, %v885
    %v887 = vsel %vm431, %v813, 0.0
    %v888 = vsel %vm431, %v814, 0.0
    %v889 = vadd.f32 %v887, %v888
    %v890 = vrot.slane %v889, 4
    %v891 = vadd.f32 %v889, %v890
    %v892 = vrot.slane %v891, 2
    %v893 = vadd.f32 %v891, %v892
    %v894 = vrot.slane %v893, 1
    %v895 = vadd.f32 %v893, %v894
    %v896 = vsel %vm431, %v815, 0.0
    %v897 = vsel %vm431, %v816, 0.0
    %v898 = vadd.f32 %v896, %v897
    %v899 = vrot.slane %v898, 4
    %v900 = vadd.f32 %v898, %v899
    %v901 = vrot.slane %v900, 2
    %v902 = vadd.f32 %v900, %v901
    %v903 = vrot.slane %v902, 1
    %v904 = vadd.f32 %v902, %v903
    %v905 = vsel %vm431, %v817, 0.0
    %v906 = vsel %vm431, %v818, 0.0
    %v907 = vadd.f32 %v905, %v906
    %v908 = vrot.slane %v907, 4
    %v909 = vadd.f32 %v907, %v908
    %v910 = vrot.slane %v909, 2
    %v911 = vadd.f32 %v909, %v910
    %v912 = vrot.slane %v911, 1
    %v913 = vadd.f32 %v911, %v912
    %v914 = vsel %vm431, %v819, 0.0
    %v915 = vsel %vm431, %v820, 0.0
    %v916 = vadd.f32 %v914, %v915
    %v917 = vrot.slane %v916, 4
    %v918 = vadd.f32 %v916, %v917
    %v919 = vrot.slane %v918, 2
    %v920 = vadd.f32 %v918, %v919
    %v921 = vrot.slane %v920, 1
    %v922 = vadd.f32 %v920, %v921
    %v923 = vsel %vm431, %v821, 0.0
    %v924 = vsel %vm431, %v822, 0.0
    %v925 = vadd.f32 %v923, %v924
    %v926 = vrot.slane %v925, 4
    %v927 = vadd.f32 %v925, %v926
    %v928 = vrot.slane %v927, 2
    %v929 = vadd.f32 %v927, %v928
    %v930 = vrot.slane %v929, 1
    %v931 = vadd.f32 %v929, %v930
    %v932 = vsel %vm431, %v823, 0.0
    %v933 = vsel %vm431, %v824, 0.0
    %v934 = vadd.f32 %v932, %v933
    %v935 = vrot.slane %v934, 4
    %v936 = vadd.f32 %v934, %v935
    %v937 = vrot.slane %v936, 2
    %v938 = vadd.f32 %v936, %v937
    %v939 = vrot.slane %v938, 1
    %v940 = vadd.f32 %v938, %v939
    %v941 = vsel %vm431, %v825, 0.0
    %v942 = vsel %vm431, %v826, 0.0
    %v943 = vadd.f32 %v941, %v942
    %v944 = vrot.slane %v943, 4
    %v945 = vadd.f32 %v943, %v944
    %v946 = vrot.slane %v945, 2
    %v947 = vadd.f32 %v945, %v946
    %v948 = vrot.slane %v947, 1
    %v949 = vadd.f32 %v947, %v948
    %v950 = vsel %vm431, %v827, 0.0
    %v951 = vsel %vm431, %v828, 0.0
    %v952 = vadd.f32 %v950, %v951
    %v953 = vrot.slane %v952, 4
    %v954 = vadd.f32 %v952, %v953
    %v955 = vrot.slane %v954, 2
    %v956 = vadd.f32 %v954, %v955
    %v957 = vrot.slane %v956, 1
    %v958 = vadd.f32 %v956, %v957
    %v959 = vsel %vm431, %v829, 0.0
    %v960 = vsel %vm431, %v830, 0.0
    %v961 = vadd.f32 %v959, %v960
    %v962 = vrot.slane %v961, 4
    %v963 = vadd.f32 %v961, %v962
    %v964 = vrot.slane %v963, 2
    %v965 = vadd.f32 %v963, %v964
    %v966 = vrot.slane %v965, 1
    %v967 = vadd.f32 %v965, %v966
    %v968 = vsel %vm431, %v831, 0.0
    %v969 = vsel %vm431, %v832, 0.0
    %v970 = vadd.f32 %v968, %v969
    %v971 = vrot.slane %v970, 4
    %v972 = vadd.f32 %v970, %v971
    %v973 = vrot.slane %v972, 2
    %v974 = vadd.f32 %v972, %v973
    %v975 = vrot.slane %v974, 1
    %v976 = vadd.f32 %v974, %v975
    %s977 = scalar_lea.vmem %s6, 64
    %v978 = vld [vmem:[%s977] sm:$0xff]
    %v979 = vld [vmem:[%s977 + $0x8] sm:$0xff]
    %v980 = vld [vmem:[%s977 + $0x10] sm:$0xff]
    %v981 = vld [vmem:[%s977 + $0x18] sm:$0xff]
    %v982 = vld [vmem:[%s977 + $0x20] sm:$0xff]
    %v983 = vld [vmem:[%s977 + $0x28] sm:$0xff]
    %v984 = vld [vmem:[%s977 + $0x30] sm:$0xff]
    %v985 = vld [vmem:[%s977 + $0x38] sm:$0xff]
    %s986 = scalar_lea.vmem [#allocation5], 1
    %v987 = vld [vmem:[%s986] sm:$0x1]
    %v989 = vperm.slane %v987, 0
    %v991 = vmul.f32 %v730, %v989
    %v992 = vmul.f32 %v731, %v989
    %v1009 = vsel %vm606, %v850, %v841
    %v1010 = vsel %vm608, %v859, %v1009
    %v1011 = vsel %vm610, %v868, %v1010
    %v1012 = vsel %vm612, %v877, %v1011
    %v1013 = vsel %vm614, %v886, %v1012
    %v1014 = vsel %vm616, %v895, %v1013
    %v1015 = vsel %vm618, %v904, %v1014
    %v1016 = vsel %vm606, %v922, %v913
    %v1017 = vsel %vm608, %v931, %v1016
    %v1018 = vsel %vm610, %v940, %v1017
    %v1019 = vsel %vm612, %v949, %v1018
    %v1020 = vsel %vm614, %v958, %v1019
    %v1021 = vsel %vm616, %v967, %v1020
    %v1022 = vsel %vm618, %v976, %v1021
    %v1023 = vsel %vm431, %v1015, 0
    %v1025 = vsel %vm431, %v1022, 0
    %1027 = vmatpush.msra.mxu0 0.0
    %1028 = vmatpush.msra.mxu0 0.0
    %1029 = vmatpush.msra.mxu0 0.0
    %1030 = vmatpush.msra.mxu0 0.0
    %1031 = vmatpush.msra.mxu0 0.0
    %1032 = vmatpush.msra.mxu0 0.0
    %1033 = vmatpush.msra.mxu0 0.0
    %1034 = vmatpush.msra.mxu0 0.0
    %1035 = vmatpush.msra.mxu0 %v985
    %1036 = vmatpush.msra.mxu0 %v984
    %1037 = vmatpush.msra.mxu0 %v983
    %1038 = vmatpush.msra.mxu0 %v982
    %1039 = vmatpush.msra.mxu0 %v981
    %1040 = vmatpush.msra.mxu0 %v980
    %1041 = vmatpush.msra.mxu0 %v979
    %1042 = vmatpush.msra.mxu0 %v978
    %1043 = vmatmul.f32.gmra.mxu0 %v1023
    %v1044 = vpop.f32.mrf.mxu0
    %v1045 = vadd.f32 %v991, %v1044
    %1046 = vmatmul.f32.gmra.mxu0 %v1025
    %v1047 = vpop.f32.mrf.mxu0
    %v1048 = vadd.f32 %v992, %v1047
    %1049 = vdwg.mxu0
    %v1050 = vmul.f32 %v1045, %v1045
    %v1051 = vmul.f32 %v1048, %v1048
    %v1052 = vmul.f32 %v1045, %v1050
    %v1053 = vmul.f32 %v1048, %v1051
    %v1054 = vmul.f32 %v1052, 0.044715
    %v1055 = vmul.f32 %v1053, 0.044715
    %v1056 = vadd.f32 %v1045, %v1054
    %v1057 = vadd.f32 %v1048, %v1055
    %v1058 = vmul.f32 %v1056, 0.7978846
    %v1059 = vmul.f32 %v1057, 0.7978846
    %v1060 = vtanh.pop %v1058
    %v1061 = vtanh.pop %v1059
    %v1062 = vadd.f32 %v1060, 1.0
    %v1063 = vadd.f32 %v1061, 1.0
    %v1064 = vmul.f32 %v1062, 0.5
    %v1065 = vmul.f32 %v1063, 0.5
    %v1066 = vmul.f32 %v1045, %v1064
    %v1067 = vmul.f32 %v1048, %v1065
    %v1068 = vadd.f32 %v672, %v1066
    %v1069 = vadd.f32 %v673, %v1067
    %s1070 = scalar_lea.vmem [#allocation7], 2
    %v1071 = vld [vmem:[%s1070] sm:$0x1]
    %s1072 = scalar_lea.vmem [#allocation8], 2
    %v1073 = vld [vmem:[%s1072] sm:$0x1]
    %v1074 = vsel %vm270, %v1068, 0.0
    %1075 = vadd.xlane.f32.xlu0 %v1074
    %v1076 = vpop.xlane.xlu0 %1075
    %v1077 = vsel %vm270, %v1069, 0.0
    %1078 = vadd.xlane.f32.xlu0 %v1077
    %v1079 = vpop.xlane.xlu0 %1078
    %v1080 = vmul.f32 %v1076, %v283
    %v1081 = vmul.f32 %v1079, %v283
    %v1082 = vsub.f32 %v1068, %v1080
    %v1083 = vsub.f32 %v1069, %v1081
    %v1084 = vmul.f32 %v1082, %v1082
    %v1085 = vmul.f32 %v1083, %v1083
    %v1086 = vsel %vm270, %v1084, 0.0
    %1087 = vadd.xlane.f32.xlu0 %v1086
    %v1088 = vpop.xlane.xlu0 %1087
    %v1089 = vsel %vm270, %v1085, 0.0
    %1090 = vadd.xlane.f32.xlu0 %v1089
    %v1091 = vpop.xlane.xlu0 %1090
    %v1092 = vmul.f32 %v1088, %v283
    %v1093 = vmul.f32 %v1091, %v283
    %v1094 = vadd.f32 %v1092, 1e-05
    %v1095 = vadd.f32 %v1093, 1e-05
    %v1096 = vrsqrt.pop %v1094
    %v1097 = vmul.f32 %v1096, %v1094
    %v1098 = vmul.f32 %v1097, %v1096
    %v1099 = vmul.f32 0.5, %v1098
    %v1100 = vsub.f32 1.5, %v1099
    %v1101 = vmul.f32 %v1096, %v1100
    %vm1102 = vweird.f32 %v1094
    %vm1103 = vweird.f32 %v1096
    %vm1104 = vmor %vm1102, %vm1103
    %v1105 = vsel %vm1104, %v1096, %v1101
    %v1106 = vrsqrt.pop %v1095
    %v1107 = vmul.f32 %v1106, %v1095
    %v1108 = vmul.f32 %v1107, %v1106
    %v1109 = vmul.f32 0.5, %v1108
    %v1110 = vsub.f32 1.5, %v1109
    %v1111 = vmul.f32 %v1106, %v1110
    %vm1112 = vweird.f32 %v1095
    %vm1113 = vweird.f32 %v1106
    %vm1114 = vmor %vm1112, %vm1113
    %v1115 = vsel %vm1114, %v1106, %v1111
    %v1116 = vmul.f32 %v1082, %v1105
    %v1117 = vmul.f32 %v1083, %v1115
    %v1119 = vperm.slane %v1071, 0
    %v1121 = vmul.f32 %v1116, %v1119
    %v1122 = vmul.f32 %v1117, %v1119
    %v1124 = vperm.slane %v1073, 0
    %v1126 = vadd.f32 %v1121, %v1124
    %v1127 = vadd.f32 %v1122, %v1124
    %s1128 = scalar_lea.vmem %s5, 48
    %v1129 = vld [vmem:[%s1128] sm:$0xff]
    %v1130 = vld [vmem:[%s1128 + $0x8] sm:$0xff]
    %v1131 = vld [vmem:[%s1128 + $0x10] sm:$0xf]
    %v1133 = vsel %vm270, %v1126, 0
    %v1136 = vsel %vm270, %v1127, 0
    %v1139 = vsel %vm207, %v1131, 0
    %1141 = vmatpush.msra.mxu0 0.0
    %1142 = vmatpush.msra.mxu0 0.0
    %1143 = vmatpush.msra.mxu0 0.0
    %1144 = vmatpush.msra.mxu0 0.0
    %1145 = vmatpush.msra.mxu0 0.0
    %1146 = vmatpush.msra.mxu0 0.0
    %1147 = vmatpush.msra.mxu0 0.0
    %1148 = vmatpush.msra.mxu0 0.0
    %1149 = vmatpush.msra.mxu0 0.0
    %1150 = vmatpush.msra.mxu0 0.0
    %1151 = vmatpush.msra.mxu0 0.0
    %1152 = vmatpush.msra.mxu0 0.0
    %1153 = vmatpush.msra.mxu0 0.0
    %1154 = vmatpush.msra.mxu0 %v1139
    %1155 = vmatpush.msra.mxu0 %v1130
    %1156 = vmatpush.msra.mxu0 %v1129
    %1157 = vmatmul.f32.gmra.mxu0 %v1133
    %v1158 = vpop.f32.mrf.mxu0
    %v1159 = vadd.f32 0.0, %v1158
    %1160 = vmatmul.f32.gmra.mxu0 %v1136
    %v1161 = vpop.f32.mrf.mxu0
    %v1162 = vadd.f32 0.0, %v1161
    %1163 = vdwg.mxu0
    %s1164 = scalar_lea.vmem [#allocation2], 512
    %v1165 = vld [vmem:[%s1164] sm:$0xff]
    %v1166 = vld [vmem:[%s1164 + $0x8] sm:$0xff]
    %v1167 = vld [vmem:[%s1164 + $0x10] sm:$0xff]
    %v1168 = vld [vmem:[%s1164 + $0x18] sm:$0xff]
    %v1169 = vld [vmem:[%s1164 + $0x20] sm:$0xff]
    %v1170 = vld [vmem:[%s1164 + $0x28] sm:$0xff]
    %v1171 = vld [vmem:[%s1164 + $0x30] sm:$0xff]
    %v1172 = vld [vmem:[%s1164 + $0x38] sm:$0xff]
    %v1173 = vld [vmem:[%s1164 + $0x40] sm:$0xff]
    %v1174 = vld [vmem:[%s1164 + $0x48] sm:$0xff]
    %v1175 = vld [vmem:[%s1164 + $0x50] sm:$0xff]
    %v1176 = vld [vmem:[%s1164 + $0x58] sm:$0xff]
    %v1177 = vld [vmem:[%s1164 + $0x60] sm:$0xff]
    %v1178 = vld [vmem:[%s1164 + $0x68] sm:$0xff]
    %v1179 = vld [vmem:[%s1164 + $0x70] sm:$0xff]
    %v1180 = vld [vmem:[%s1164 + $0x78] sm:$0xff]
    %v1181 = vld [vmem:[%s1164 + $0x80] sm:$0xff]
    %v1182 = vld [vmem:[%s1164 + $0x88] sm:$0xff]
    %v1183 = vld [vmem:[%s1164 + $0x90] sm:$0xff]
    %v1184 = vld [vmem:[%s1164 + $0x98] sm:$0xff]
    %v1185 = vld [vmem:[%s1164 + $0xa0] sm:$0xff]
    %v1186 = vld [vmem:[%s1164 + $0xa8] sm:$0xff]
    %v1187 = vld [vmem:[%s1164 + $0xb0] sm:$0xff]
    %v1188 = vld [vmem:[%s1164 + $0xb8] sm:$0xff]
    %v1189 = vld [vmem:[%s1164 + $0xc0] sm:$0xff]
    %v1190 = vld [vmem:[%s1164 + $0xc8] sm:$0xff]
    %v1191 = vld [vmem:[%s1164 + $0xd0] sm:$0xff]
    %v1192 = vld [vmem:[%s1164 + $0xd8] sm:$0xff]
    %v1193 = vld [vmem:[%s1164 + $0xe0] sm:$0xff]
    %v1194 = vld [vmem:[%s1164 + $0xe8] sm:$0xff]
    %v1195 = vld [vmem:[%s1164 + $0xf0] sm:$0xff]
    %v1196 = vld [vmem:[%s1164 + $0xf8] sm:$0xff]
    %v1197 = vmul.f32 %v1165, %v1159
    %v1198 = vmul.f32 %v1166, %v1162
    %v1199 = vmul.f32 %v1167, %v1159
    %v1200 = vmul.f32 %v1168, %v1162
    %v1201 = vmul.f32 %v1169, %v1159
    %v1202 = vmul.f32 %v1170, %v1162
    %v1203 = vmul.f32 %v1171, %v1159
    %v1204 = vmul.f32 %v1172, %v1162
    %v1205 = vmul.f32 %v1173, %v1159
    %v1206 = vmul.f32 %v1174, %v1162
    %v1207 = vmul.f32 %v1175, %v1159
    %v1208 = vmul.f32 %v1176, %v1162
    %v1209 = vmul.f32 %v1177, %v1159
    %v1210 = vmul.f32 %v1178, %v1162
    %v1211 = vmul.f32 %v1179, %v1159
    %v1212 = vmul.f32 %v1180, %v1162
    %v1213 = vmul.f32 %v1181, %v1159
    %v1214 = vmul.f32 %v1182, %v1162
    %v1215 = vmul.f32 %v1183, %v1159
    %v1216 = vmul.f32 %v1184, %v1162
    %v1217 = vmul.f32 %v1185, %v1159
    %v1218 = vmul.f32 %v1186, %v1162
    %v1219 = vmul.f32 %v1187, %v1159
    %v1220 = vmul.f32 %v1188, %v1162
    %v1221 = vmul.f32 %v1189, %v1159
    %v1222 = vmul.f32 %v1190, %v1162
    %v1223 = vmul.f32 %v1191, %v1159
    %v1224 = vmul.f32 %v1192, %v1162
    %v1225 = vmul.f32 %v1193, %v1159
    %v1226 = vmul.f32 %v1194, %v1162
    %v1227 = vmul.f32 %v1195, %v1159
    %v1228 = vmul.f32 %v1196, %v1162
    %v1229 = vsel %vm431, %v1197, 0.0
    %v1230 = vsel %vm431, %v1198, 0.0
    %v1231 = vadd.f32 %v1229, %v1230
    %v1232 = vrot.slane %v1231, 4
    %v1233 = vadd.f32 %v1231, %v1232
    %v1234 = vrot.slane %v1233, 2
    %v1235 = vadd.f32 %v1233, %v1234
    %v1236 = vrot.slane %v1235, 1
    %v1237 = vadd.f32 %v1235, %v1236
    %v1238 = vsel %vm431, %v1199, 0.0
    %v1239 = vsel %vm431, %v1200, 0.0
    %v1240 = vadd.f32 %v1238, %v1239
    %v1241 = vrot.slane %v1240, 4
    %v1242 = vadd.f32 %v1240, %v1241
    %v1243 = vrot.slane %v1242, 2
    %v1244 = vadd.f32 %v1242, %v1243
    %v1245 = vrot.slane %v1244, 1
    %v1246 = vadd.f32 %v1244, %v1245
    %v1247 = vsel %vm431, %v1201, 0.0
    %v1248 = vsel %vm431, %v1202, 0.0
    %v1249 = vadd.f32 %v1247, %v1248
    %v1250 = vrot.slane %v1249, 4
    %v1251 = vadd.f32 %v1249, %v1250
    %v1252 = vrot.slane %v1251, 2
    %v1253 = vadd.f32 %v1251, %v1252
    %v1254 = vrot.slane %v1253, 1
    %v1255 = vadd.f32 %v1253, %v1254
    %v1256 = vsel %vm431, %v1203, 0.0
    %v1257 = vsel %vm431, %v1204, 0.0
    %v1258 = vadd.f32 %v1256, %v1257
    %v1259 = vrot.slane %v1258, 4
    %v1260 = vadd.f32 %v1258, %v1259
    %v1261 = vrot.slane %v1260, 2
    %v1262 = vadd.f32 %v1260, %v1261
    %v1263 = vrot.slane %v1262, 1
    %v1264 = vadd.f32 %v1262, %v1263
    %v1265 = vsel %vm431, %v1205, 0.0
    %v1266 = vsel %vm431, %v1206, 0.0
    %v1267 = vadd.f32 %v1265, %v1266
    %v1268 = vrot.slane %v1267, 4
    %v1269 = vadd.f32 %v1267, %v1268
    %v1270 = vrot.slane %v1269, 2
    %v1271 = vadd.f32 %v1269, %v1270
    %v1272 = vrot.slane %v1271, 1
    %v1273 = vadd.f32 %v1271, %v1272
    %v1274 = vsel %vm431, %v1207, 0.0
    %v1275 = vsel %vm431, %v1208, 0.0
    %v1276 = vadd.f32 %v1274, %v1275
    %v1277 = vrot.slane %v1276, 4
    %v1278 = vadd.f32 %v1276, %v1277
    %v1279 = vrot.slane %v1278, 2
    %v1280 = vadd.f32 %v1278, %v1279
    %v1281 = vrot.slane %v1280, 1
    %v1282 = vadd.f32 %v1280, %v1281
    %v1283 = vsel %vm431, %v1209, 0.0
    %v1284 = vsel %vm431, %v1210, 0.0
    %v1285 = vadd.f32 %v1283, %v1284
    %v1286 = vrot.slane %v1285, 4
    %v1287 = vadd.f32 %v1285, %v1286
    %v1288 = vrot.slane %v1287, 2
    %v1289 = vadd.f32 %v1287, %v1288
    %v1290 = vrot.slane %v1289, 1
    %v1291 = vadd.f32 %v1289, %v1290
    %v1292 = vsel %vm431, %v1211, 0.0
    %v1293 = vsel %vm431, %v1212, 0.0
    %v1294 = vadd.f32 %v1292, %v1293
    %v1295 = vrot.slane %v1294, 4
    %v1296 = vadd.f32 %v1294, %v1295
    %v1297 = vrot.slane %v1296, 2
    %v1298 = vadd.f32 %v1296, %v1297
    %v1299 = vrot.slane %v1298, 1
    %v1300 = vadd.f32 %v1298, %v1299
    %v1301 = vsel %vm431, %v1213, 0.0
    %v1302 = vsel %vm431, %v1214, 0.0
    %v1303 = vadd.f32 %v1301, %v1302
    %v1304 = vrot.slane %v1303, 4
    %v1305 = vadd.f32 %v1303, %v1304
    %v1306 = vrot.slane %v1305, 2
    %v1307 = vadd.f32 %v1305, %v1306
    %v1308 = vrot.slane %v1307, 1
    %v1309 = vadd.f32 %v1307, %v1308
    %v1310 = vsel %vm431, %v1215, 0.0
    %v1311 = vsel %vm431, %v1216, 0.0
    %v1312 = vadd.f32 %v1310, %v1311
    %v1313 = vrot.slane %v1312, 4
    %v1314 = vadd.f32 %v1312, %v1313
    %v1315 = vrot.slane %v1314, 2
    %v1316 = vadd.f32 %v1314, %v1315
    %v1317 = vrot.slane %v1316, 1
    %v1318 = vadd.f32 %v1316, %v1317
    %v1319 = vsel %vm431, %v1217, 0.0
    %v1320 = vsel %vm431, %v1218, 0.0
    %v1321 = vadd.f32 %v1319, %v1320
    %v1322 = vrot.slane %v1321, 4
    %v1323 = vadd.f32 %v1321, %v1322
    %v1324 = vrot.slane %v1323, 2
    %v1325 = vadd.f32 %v1323, %v1324
    %v1326 = vrot.slane %v1325, 1
    %v1327 = vadd.f32 %v1325, %v1326
    %v1328 = vsel %vm431, %v1219, 0.0
    %v1329 = vsel %vm431, %v1220, 0.0
    %v1330 = vadd.f32 %v1328, %v1329
    %v1331 = vrot.slane %v1330, 4
    %v1332 = vadd.f32 %v1330, %v1331
    %v1333 = vrot.slane %v1332, 2
    %v1334 = vadd.f32 %v1332, %v1333
    %v1335 = vrot.slane %v1334, 1
    %v1336 = vadd.f32 %v1334, %v1335
    %v1337 = vsel %vm431, %v1221, 0.0
    %v1338 = vsel %vm431, %v1222, 0.0
    %v1339 = vadd.f32 %v1337, %v1338
    %v1340 = vrot.slane %v1339, 4
    %v1341 = vadd.f32 %v1339, %v1340
    %v1342 = vrot.slane %v1341, 2
    %v1343 = vadd.f32 %v1341, %v1342
    %v1344 = vrot.slane %v1343, 1
    %v1345 = vadd.f32 %v1343, %v1344
    %v1346 = vsel %vm431, %v1223, 0.0
    %v1347 = vsel %vm431, %v1224, 0.0
    %v1348 = vadd.f32 %v1346, %v1347
    %v1349 = vrot.slane %v1348, 4
    %v1350 = vadd.f32 %v1348, %v1349
    %v1351 = vrot.slane %v1350, 2
    %v1352 = vadd.f32 %v1350, %v1351
    %v1353 = vrot.slane %v1352, 1
    %v1354 = vadd.f32 %v1352, %v1353
    %v1355 = vsel %vm431, %v1225, 0.0
    %v1356 = vsel %vm431, %v1226, 0.0
    %v1357 = vadd.f32 %v1355, %v1356
    %v1358 = vrot.slane %v1357, 4
    %v1359 = vadd.f32 %v1357, %v1358
    %v1360 = vrot.slane %v1359, 2
    %v1361 = vadd.f32 %v1359, %v1360
    %v1362 = vrot.slane %v1361, 1
    %v1363 = vadd.f32 %v1361, %v1362
    %v1364 = vsel %vm431, %v1227, 0.0
    %v1365 = vsel %vm431, %v1228, 0.0
    %v1366 = vadd.f32 %v1364, %v1365
    %v1367 = vrot.slane %v1366, 4
    %v1368 = vadd.f32 %v1366, %v1367
    %v1369 = vrot.slane %v1368, 2
    %v1370 = vadd.f32 %v1368, %v1369
    %v1371 = vrot.slane %v1370, 1
    %v1372 = vadd.f32 %v1370, %v1371
    %s1373 = scalar_lea.vmem %s6, 128
    %v1374 = vld [vmem:[%s1373] sm:$0xff]
    %v1375 = vld [vmem:[%s1373 + $0x8] sm:$0xff]
    %v1376 = vld [vmem:[%s1373 + $0x10] sm:$0xff]
    %v1377 = vld [vmem:[%s1373 + $0x18] sm:$0xff]
    %v1378 = vld [vmem:[%s1373 + $0x20] sm:$0xff]
    %v1379 = vld [vmem:[%s1373 + $0x28] sm:$0xff]
    %v1380 = vld [vmem:[%s1373 + $0x30] sm:$0xff]
    %v1381 = vld [vmem:[%s1373 + $0x38] sm:$0xff]
    %s1382 = scalar_lea.vmem [#allocation5], 2
    %v1383 = vld [vmem:[%s1382] sm:$0x1]
    %v1385 = vperm.slane %v1383, 0
    %v1387 = vmul.f32 %v1126, %v1385
    %v1388 = vmul.f32 %v1127, %v1385
    %v1405 = vsel %vm606, %v1246, %v1237
    %v1406 = vsel %vm608, %v1255, %v1405
    %v1407 = vsel %vm610, %v1264, %v1406
    %v1408 = vsel %vm612, %v1273, %v1407
    %v1409 = vsel %vm614, %v1282, %v1408
    %v1410 = vsel %vm616, %v1291, %v1409
    %v1411 = vsel %vm618, %v1300, %v1410
    %v1412 = vsel %vm606, %v1318, %v1309
    %v1413 = vsel %vm608, %v1327, %v1412
    %v1414 = vsel %vm610, %v1336, %v1413
    %v1415 = vsel %vm612, %v1345, %v1414
    %v1416 = vsel %vm614, %v1354, %v1415
    %v1417 = vsel %vm616, %v1363, %v1416
    %v1418 = vsel %vm618, %v1372, %v1417
    %v1419 = vsel %vm431, %v1411, 0
    %v1421 = vsel %vm431, %v1418, 0
    %1423 = vmatpush.msra.mxu0 0.0
    %1424 = vmatpush.msra.mxu0 0.0
    %1425 = vmatpush.msra.mxu0 0.0
    %1426 = vmatpush.msra.mxu0 0.0
    %1427 = vmatpush.msra.mxu0 0.0
    %1428 = vmatpush.msra.mxu0 0.0
    %1429 = vmatpush.msra.mxu0 0.0
    %1430 = vmatpush.msra.mxu0 0.0
    %1431 = vmatpush.msra.mxu0 %v1381
    %1432 = vmatpush.msra.mxu0 %v1380
    %1433 = vmatpush.msra.mxu0 %v1379
    %1434 = vmatpush.msra.mxu0 %v1378
    %1435 = vmatpush.msra.mxu0 %v1377
    %1436 = vmatpush.msra.mxu0 %v1376
    %1437 = vmatpush.msra.mxu0 %v1375
    %1438 = vmatpush.msra.mxu0 %v1374
    %1439 = vmatmul.f32.gmra.mxu0 %v1419
    %v1440 = vpop.f32.mrf.mxu0
    %v1441 = vadd.f32 %v1387, %v1440
    %1442 = vmatmul.f32.gmra.mxu0 %v1421
    %v1443 = vpop.f32.mrf.mxu0
    %v1444 = vadd.f32 %v1388, %v1443
    %1445 = vdwg.mxu0
    %v1446 = vmul.f32 %v1441, %v1441
    %v1447 = vmul.f32 %v1444, %v1444
    %v1448 = vmul.f32 %v1441, %v1446
    %v1449 = vmul.f32 %v1444, %v1447
    %v1450 = vmul.f32 %v1448, 0.044715
    %v1451 = vmul.f32 %v1449, 0.044715
    %v1452 = vadd.f32 %v1441, %v1450
    %v1453 = vadd.f32 %v1444, %v1451
    %v1454 = vmul.f32 %v1452, 0.7978846
    %v1455 = vmul.f32 %v1453, 0.7978846
    %v1456 = vtanh.pop %v1454
    %v1457 = vtanh.pop %v1455
    %v1458 = vadd.f32 %v1456, 1.0
    %v1459 = vadd.f32 %v1457, 1.0
    %v1460 = vmul.f32 %v1458, 0.5
    %v1461 = vmul.f32 %v1459, 0.5
    %v1462 = vmul.f32 %v1441, %v1460
    %v1463 = vmul.f32 %v1444, %v1461
    %v1464 = vadd.f32 %v1068, %v1462
    %v1465 = vadd.f32 %v1069, %v1463
    %v1466 = vld [vmem:[%s10] sm:$0x3]
    %vm1467 = vcmask 130048
    %v1469 = vsel %vm1467, %v1466, 0
    %1471 = vmatpush.msra.mxu0 0.0
    %1472 = vmatpush.msra.mxu0 0.0
    %1473 = vmatpush.msra.mxu0 0.0
    %1474 = vmatpush.msra.mxu0 0.0
    %1475 = vmatpush.msra.mxu0 0.0
    %1476 = vmatpush.msra.mxu0 0.0
    %1477 = vmatpush.msra.mxu0 0.0
    %1478 = vmatpush.msra.mxu0 0.0
    %1479 = vmatpush.msra.mxu0 0.0
    %1480 = vmatpush.msra.mxu0 0.0
    %1481 = vmatpush.msra.mxu0 0.0
    %1482 = vmatpush.msra.mxu0 0.0
    %1483 = vmatpush.msra.mxu0 0.0
    %1484 = vmatpush.msra.mxu0 0.0
    %1485 = vmatpush.msra.mxu0 %v1465
    %1486 = vmatpush.msra.mxu0 %v1464
    %1487 = vmatmul.f32.gmra.mxu0 %v1469
    %v1488 = vpop.f32.mrf.mxu0
    %v1489 = vadd.f32 0.0, %v1488
    %1490 = vdwg.mxu0
    %v1491 = vld [vmem:[%s12] sm:$0xff]
    %v1492 = vld [vmem:[%s12 + $0x8] sm:$0xff]
    %v1493 = vld [vmem:[%s12 + $0x10] sm:$0xff]
    %v1494 = vld [vmem:[%s12 + $0x18] sm:$0xff]
    %v1495 = vld [vmem:[%s12 + $0x20] sm:$0xf]
    %v1496 = vld [vmem:[%s12 + $0x28] sm:$0xf]
    %v1497 = vld [vmem:[%s11] sm:$0x3]
    %v1498 = vld [vmem:[#allocation10] sm:$0x77]
    %1500 = vst [vmem:[#allocation1] ss:$2 sm:$0xff] %v1498
    %v1501 = vld.sshfl [vmem:[#allocation1] sm:$0xff pattern:$0x75316420]
    %v1502 = vld.sshfl [vmem:[#allocation1 + $0x8] sm:$0xff pattern:$0x75316420]
    %vm1503 = vcmask 23552
    %v1505 = vsel %vm1503, %v1497, 0
    %vm1507 = vcmask 1042432
    %v1508 = vsel %vm1507, %v1501, 0
    %v1510 = vsel %vm1507, %v1502, 0
    %1512 = vmatpush.msra.mxu0 0.0
    %1513 = vmatpush.msra.mxu0 0.0
    %1514 = vmatpush.msra.mxu0 0.0
    %1515 = vmatpush.msra.mxu0 0.0
    %1516 = vmatpush.msra.mxu0 0.0
    %1517 = vmatpush.msra.mxu0 0.0
    %1518 = vmatpush.msra.mxu0 0.0
    %1519 = vmatpush.msra.mxu0 0.0
    %1520 = vmatpush.msra.mxu0 0.0
    %1521 = vmatpush.msra.mxu0 0.0
    %1522 = vmatpush.msra.mxu0 0.0
    %1523 = vmatpush.msra.mxu0 0.0
    %1524 = vmatpush.msra.mxu0 0.0
    %1525 = vmatpush.msra.mxu0 0.0
    %1526 = vmatpush.msra.mxu0 0.0
    %1527 = vmatpush.msra.mxu0 %v1508
    %1528 = vmatmul.f32.gmra.mxu0 %v1505
    %v1529 = vpop.f32.mrf.mxu0
    %v1530 = vadd.f32 0.0, %v1529
    %1531 = vdwg.mxu0
    %1532 = vmatpush.msra.mxu0 0.0
    %1533 = vmatpush.msra.mxu0 0.0
    %1534 = vmatpush.msra.mxu0 0.0
    %1535 = vmatpush.msra.mxu0 0.0
    %1536 = vmatpush.msra.mxu0 0.0
    %1537 = vmatpush.msra.mxu0 0.0
    %1538 = vmatpush.msra.mxu0 0.0
    %1539 = vmatpush.msra.mxu0 0.0
    %1540 = vmatpush.msra.mxu0 0.0
    %1541 = vmatpush.msra.mxu0 0.0
    %1542 = vmatpush.msra.mxu0 0.0
    %1543 = vmatpush.msra.mxu0 0.0
    %1544 = vmatpush.msra.mxu0 0.0
    %1545 = vmatpush.msra.mxu0 0.0
    %1546 = vmatpush.msra.mxu0 0.0
    %1547 = vmatpush.msra.mxu0 %v1510
    %1548 = vmatmul.f32.gmra.mxu0 %v1505
    %v1549 = vpop.f32.mrf.mxu0
    %v1550 = vadd.f32 0.0, %v1549
    %1551 = vdwg.mxu0
    %v1553 = vsel %vm270, %v1489, 0
    %v1556 = vsel %vm207, %v1495, 0
    %v1559 = vsel %vm207, %v1496, 0
    %1561 = vmatpush.msra.mxu0 0.0
    %1562 = vmatpush.msra.mxu0 0.0
    %1563 = vmatpush.msra.mxu0 0.0
    %1564 = vmatpush.msra.mxu0 0.0
    %1565 = vmatpush.msra.mxu0 0.0
    %1566 = vmatpush.msra.mxu0 0.0
    %1567 = vmatpush.msra.mxu0 0.0
    %1568 = vmatpush.msra.mxu0 0.0
    %1569 = vmatpush.msra.mxu0 0.0
    %1570 = vmatpush.msra.mxu0 0.0
    %1571 = vmatpush.msra.mxu0 0.0
    %1572 = vmatpush.msra.mxu0 0.0
    %1573 = vmatpush.msra.mxu0 0.0
    %1574 = vmatpush.msra.mxu0 %v1556
    %1575 = vmatpush.msra.mxu0 %v1493
    %1576 = vmatpush.msra.mxu0 %v1491
    %1577 = vmatmul.f32.gmra.mxu0 %v1553
    %v1578 = vpop.f32.mrf.mxu0
    %v1579 = vadd.f32 %v1530, %v1578
    %1580 = vdwg.mxu0
    %1581 = vmatpush.msra.mxu0 0.0
    %1582 = vmatpush.msra.mxu0 0.0
    %1583 = vmatpush.msra.mxu0 0.0
    %1584 = vmatpush.msra.mxu0 0.0
    %1585 = vmatpush.msra.mxu0 0.0
    %1586 = vmatpush.msra.mxu0 0.0
    %1587 = vmatpush.msra.mxu0 0.0
    %1588 = vmatpush.msra.mxu0 0.0
    %1589 = vmatpush.msra.mxu0 0.0
    %1590 = vmatpush.msra.mxu0 0.0
    %1591 = vmatpush.msra.mxu0 0.0
    %1592 = vmatpush.msra.mxu0 0.0
    %1593 = vmatpush.msra.mxu0 0.0
    %1594 = vmatpush.msra.mxu0 %v1559
    %1595 = vmatpush.msra.mxu0 %v1494
    %1596 = vmatpush.msra.mxu0 %v1492
    %1597 = vmatmul.f32.gmra.mxu0 %v1553
    %v1598 = vpop.f32.mrf.mxu0
    %v1599 = vadd.f32 %v1550, %v1598
    %1600 = vdwg.mxu0
    %v1601 = vld [vmem:[#allocation11] sm:$0x3]
    %v1603 = vperm.slane %v1601, 0
    %v1604 = vperm.slane %v1601, 1
    %v1607 = vadd.f32 %v1579, %v1603
    %v1608 = vadd.f32 %v1599, %v1604
    %v1609 = vmax.f32 %v1607, 0.0
    %v1610 = vmax.f32 %v1608, 0.0
    %v1611 = vld [vmem:[%s15] sm:$0xff]
    %v1612 = vld [vmem:[%s15 + $0x8] sm:$0xff]
    %v1613 = vld [vmem:[%s15 + $0x10] sm:$0xff]
    %v1614 = vld [vmem:[%s15 + $0x18] sm:$0xff]
    %v1615 = vld [vmem:[%s15 + $0x20] sm:$0xff]
    %v1616 = vld [vmem:[%s15 + $0x28] sm:$0xff]
    %v1617 = vld [vmem:[%s15 + $0x30] sm:$0xff]
    %v1618 = vld [vmem:[%s15 + $0x38] sm:$0xff]
    %v1619 = vld [vmem:[%s15 + $0x40] sm:$0xff]
    %v1620 = vld [vmem:[%s15 + $0x48] sm:$0xff]
    %v1621 = vld [vmem:[%s15 + $0x50] sm:$0xff]
    %v1622 = vld [vmem:[%s15 + $0x58] sm:$0xff]
    %v1623 = vld [vmem:[%s15 + $0x60] sm:$0xff]
    %v1624 = vld [vmem:[%s15 + $0x68] sm:$0xff]
    %v1625 = vld [vmem:[%s15 + $0x70] sm:$0xff]
    %v1626 = vld [vmem:[%s15 + $0x78] sm:$0xff]
    %v1627 = vld [vmem:[%s15 + $0x80] sm:$0xff]
    %v1628 = vld [vmem:[%s15 + $0x88] sm:$0xff]
    %v1629 = vld [vmem:[%s15 + $0x90] sm:$0xff]
    %v1630 = vld [vmem:[%s15 + $0x98] sm:$0xff]
    %v1631 = vld [vmem:[%s15 + $0xa0] sm:$0xff]
    %v1632 = vld [vmem:[%s15 + $0xa8] sm:$0xff]
    %v1633 = vld [vmem:[%s15 + $0xb0] sm:$0xff]
    %v1634 = vld [vmem:[%s15 + $0xb8] sm:$0xff]
    %v1635 = vld [vmem:[#allocation13] sm:$0x1]
    %v1637 = vperm.slane %v1635, 0
    %v1640 = vsel %vm431, %v1610, 0
    %1642 = vmatpush.msra.mxu0 %v1626
    %1643 = vmatpush.msra.mxu0 %v1625
    %1644 = vmatpush.msra.mxu0 %v1624
    %1645 = vmatpush.msra.mxu0 %v1623
    %1646 = vmatpush.msra.mxu0 %v1622
    %1647 = vmatpush.msra.mxu0 %v1621
    %1648 = vmatpush.msra.mxu0 %v1620
    %1649 = vmatpush.msra.mxu0 %v1619
    %1650 = vmatpush.msra.mxu0 %v1618
    %1651 = vmatpush.msra.mxu0 %v1617
    %1652 = vmatpush.msra.mxu0 %v1616
    %1653 = vmatpush.msra.mxu0 %v1615
    %1654 = vmatpush.msra.mxu0 %v1614
    %1655 = vmatpush.msra.mxu0 %v1613
    %1656 = vmatpush.msra.mxu0 %v1612
    %1657 = vmatpush.msra.mxu0 %v1611
    %1658 = vmatmul.f32.gmra.mxu0 %v1609
    %v1659 = vpop.f32.mrf.mxu0
    %v1660 = vadd.f32 %v1637, %v1659
    %1661 = vdwg.mxu0
    %1662 = vmatpush.msra.mxu0 0.0
    %1663 = vmatpush.msra.mxu0 0.0
    %1664 = vmatpush.msra.mxu0 0.0
    %1665 = vmatpush.msra.mxu0 0.0
    %1666 = vmatpush.msra.mxu0 0.0
    %1667 = vmatpush.msra.mxu0 0.0
    %1668 = vmatpush.msra.mxu0 0.0
    %1669 = vmatpush.msra.mxu0 0.0
    %1670 = vmatpush.msra.mxu0 %v1634
    %1671 = vmatpush.msra.mxu0 %v1633
    %1672 = vmatpush.msra.mxu0 %v1632
    %1673 = vmatpush.msra.mxu0 %v1631
    %1674 = vmatpush.msra.mxu0 %v1630
    %1675 = vmatpush.msra.mxu0 %v1629
    %1676 = vmatpush.msra.mxu0 %v1628
    %1677 = vmatpush.msra.mxu0 %v1627
    %1678 = vmatmul.f32.gmra.mxu0 %v1640
    %v1679 = vpop.f32.mrf.mxu0
    %v1680 = vadd.f32 %v1660, %v1679
    %1681 = vdwg.mxu0
    %v1682 = vmax.f32 %v1680, 0.0
    %v1683 = vld [vmem:[%s17] sm:$0xff]
    %v1684 = vld [vmem:[%s17 + $0x8] sm:$0xff]
    %v1685 = vld [vmem:[%s17 + $0x10] sm:$0xff]
    %v1686 = vld [vmem:[%s17 + $0x18] sm:$0xff]
    %v1687 = vld [vmem:[%s17 + $0x20] sm:$0xff]
    %v1688 = vld [vmem:[%s17 + $0x28] sm:$0xff]
    %v1689 = vld [vmem:[%s17 + $0x30] sm:$0xff]
    %v1690 = vld [vmem:[%s17 + $0x38] sm:$0xff]
    %v1691 = vld [vmem:[%s17 + $0x40] sm:$0xff]
    %v1692 = vld [vmem:[%s17 + $0x48] sm:$0xff]
    %v1693 = vld [vmem:[%s17 + $0x50] sm:$0xff]
    %v1694 = vld [vmem:[%s17 + $0x58] sm:$0xff]
    %v1695 = vld [vmem:[#allocation14] sm:$0x1]
    %v1697 = vperm.slane %v1695, 0
    %vm1699 = vcmask 785408
    %v1701 = vsel %vm1699, %v1682, 0
    %1703 = vmatpush.msra.mxu0 0.0
    %1704 = vmatpush.msra.mxu0 0.0
    %1705 = vmatpush.msra.mxu0 0.0
    %1706 = vmatpush.msra.mxu0 0.0
    %1707 = vmatpush.msra.mxu0 %v1694
    %1708 = vmatpush.msra.mxu0 %v1693
    %1709 = vmatpush.msra.mxu0 %v1692
    %1710 = vmatpush.msra.mxu0 %v1691
    %1711 = vmatpush.msra.mxu0 %v1690
    %1712 = vmatpush.msra.mxu0 %v1689
    %1713 = vmatpush.msra.mxu0 %v1688
    %1714 = vmatpush.msra.mxu0 %v1687
    %1715 = vmatpush.msra.mxu0 %v1686
    %1716 = vmatpush.msra.mxu0 %v1685
    %1717 = vmatpush.msra.mxu0 %v1684
    %1718 = vmatpush.msra.mxu0 %v1683
    %1719 = vmatmul.f32.gmra.mxu0 %v1701
    %v1720 = vpop.f32.mrf.mxu0
    %v1721 = vadd.f32 %v1697, %v1720
    %1722 = vdwg.mxu0
    %vm1723 = vcmask 17408
    %1724 = vst.msk [vmem:[#allocation16] sm:$0x3] %vm1723, %v1721
    // Predicated region
    $region110: #{causal_model_forward.1} parent=1 // pred_check
      _
    $region111: #{causal_model_forward.1} parent=1 // pred_check_branch
      %1726 = sbr.rel (0) target = $region113
    $region112: #{causal_model_forward.1} parent=1 // pred_region
      %1728 = vsyncadd [#allocation4], 0
      %s1730 = sshll.u32 [#allocation16], 4
      %s1731 = int_to_ptr.vmem [resolvable:$true] %s1730
      %s1732 = sshll.u32 %s19, 4
      %s1733 = int_to_ptr.hbm [resolvable:$true] %s1732
      %1735 = dma.vmem_to_hbm [thread:$0]  %s1731, 32, %s1733, [#allocation4]
    $region113: #{causal_model_forward.1} parent=1 // pred_fallthru
      _
    // Predicated region
    $region114: #{causal_model_forward.1} parent=1 // pred_check
      _
    $region115: #{causal_model_forward.1} parent=1 // pred_check_branch
      %1737 = sbr.rel (0) target = $region117
    $region116: #{causal_model_forward.1} parent=1 // pred_region
      %1739 = dma.done [#allocation4], 32
    $region117: #{causal_model_forward.1} parent=1 // pred_fallthru
      _
    %1740 = vsyncpa [#allocation3], 1
    %1741 = vsyncpa [#allocation6], 1
    %1742 = vsyncpa [#allocation9], 1
    %1743 = vsyncpa [#allocation12], 1
    %1744 = vsyncpa [#allocation15], 1
    %1745 = vsyncpa [#allocation4], 1

</llo_original>
